<compile_context>
chip_gen: v5e
topology: v5e:2x2
jax: 0.10.0
libtpu: 0.0.40
codegen_flags: <defaults>
</compile_context>

<pallas_src>
import functools

import jax
import jax.numpy as jnp
from jax.experimental import pallas as pl
from jax.experimental.pallas import tpu as pltpu


def _round_up(x, m):
    return ((x + m - 1) // m) * m


# ------------------------------ fused kernel --------------------------------

def _fused_conv_bn_lrelu_kernel(x_ref, w_ref, mask_ref, gamma_ref, beta_ref,
                                o_ref, *, tap_offsets, width, inv_count, eps,
                                slope):
    # x_ref   : (C_in, Lx)            row-flattened, spatially padded input
    # w_ref   : (KH*KW, C_out, C_in)  per-tap weight matrices
    # mask_ref: (1, width)            1.0 at flattened positions that are real outputs
    # gamma/beta: (C_out, 1)
    # o_ref   : (C_out, width)        lane-dense fused output

    # ---- convolution: accumulate one MXU matmul per (kh, kw) tap ----
    acc = None
    for t, off in enumerate(tap_offsets):             # static, unrolled
        x_sl = x_ref[:, pl.ds(off, width)]            # (C_in, width)
        w_t = w_ref[t]                                 # (C_out, C_in)
        part = jnp.dot(w_t, x_sl, preferred_element_type=jnp.float32)
        acc = part if acc is None else acc + part      # (C_out, width), f32

    # ---- BatchNorm (training-mode batch stats) folded to scale/shift ----
    mask = mask_ref[...]                               # (1, width)
    mean = jnp.sum(acc * mask, axis=1, keepdims=True) * inv_count       # (C_out,1)
    centered = acc - mean
    var = jnp.sum(centered * centered * mask, axis=1, keepdims=True) * inv_count
    scale = gamma_ref[...] * jax.lax.rsqrt(var + eps)  # rsqrt -> EUP slot
    shift = beta_ref[...] - mean * scale
    y = acc * scale + shift                            # single FMA per element

    # ---- LeakyReLU(0.1) ----
    o_ref[...] = jnp.where(y >= 0.0, y, slope * y)


# -------------------------------- wrapper ------------------------------------

def basic_conv2d(x_nchw, conv_w, gamma, beta, *, stride=1, padding=0,
                 dilation=1, eps=1e-5, negative_slope=0.1,
                 matmul_dtype=jnp.float32):
    """Forward pass of BasicConv2d.

    x_nchw: (N, C_in, H, W), conv_w: (C_out, C_in, KH, KW), gamma/beta: (C_out,).
    matmul_dtype=jnp.bfloat16 selects the fast bf16 MXU path (v6e/v7x); f32
    accumulation and f32 BN math are kept either way.
    """
    x_nchw = x_nchw.astype(jnp.float32)
    conv_w = conv_w.astype(jnp.float32)
    N, C_in, H, W = x_nchw.shape
    C_out, _, KH, KW = conv_w.shape

    Hp = H + 2 * padding
    Wp = W + 2 * padding
    OH = (Hp - dilation * (KH - 1) - 1) // stride + 1
    OW = (Wp - dilation * (KW - 1) - 1) // stride + 1

    L = N * Hp * Wp                                    # flattened padded positions
    Lc = _round_up(max(L, 128), 128)                   # lane-dense compute width
    max_off = dilation * (KH - 1) * Wp + dilation * (KW - 1)
    Lx = _round_up(Lc + max_off, 128)                  # input row length incl. tap shifts

    # Pad spatially (NCHW), flatten each channel's (N, Hp, Wp) block to one row.
    x_pad = jnp.pad(x_nchw,
                    ((0, 0), (0, 0), (padding, padding), (padding, padding)))
    x_flat = jnp.transpose(x_pad, (1, 0, 2, 3)).reshape(C_in, L)
    x_flat = jnp.pad(x_flat, ((0, 0), (0, Lx - L))).astype(matmul_dtype)

    # Per-tap weights: w_taps[kh*KW + kw] = conv_w[:, :, kh, kw] -> (C_out, C_in)
    w_taps = jnp.transpose(conv_w, (2, 3, 0, 1)).reshape(KH * KW, C_out, C_in)
    w_taps = w_taps.astype(matmul_dtype)

    # 0/1 mask of flattened positions that correspond to real conv outputs.
    hh = jnp.arange(Hp)
    ww = jnp.arange(Wp)
    h_valid = (hh % stride == 0) & ((hh // stride) < OH)
    w_valid = (ww % stride == 0) & ((ww // stride) < OW)
    mask2d = (h_valid[:, None] & w_valid[None, :]).astype(jnp.float32)
    mask = jnp.tile(mask2d.reshape(-1), (N,))
    mask = jnp.pad(mask, (0, Lc - L)).reshape(1, Lc)

    gamma2d = gamma.reshape(C_out, 1).astype(jnp.float32)
    beta2d = beta.reshape(C_out, 1).astype(jnp.float32)

    tap_offsets = tuple(kh * dilation * Wp + kw * dilation
                        for kh in range(KH) for kw in range(KW))
    inv_count = 1.0 / float(N * OH * OW)

    kernel = functools.partial(
        _fused_conv_bn_lrelu_kernel,
        tap_offsets=tap_offsets, width=Lc, inv_count=inv_count,
        eps=float(eps), slope=float(negative_slope))

    out_t = pl.pallas_call(
        kernel,
        out_shape=jax.ShapeDtypeStruct((C_out, Lc), jnp.float32),
        grid_spec=pltpu.PrefetchScalarGridSpec(
            num_scalar_prefetch=0,
            grid=(1,),                                 # single VMEM-resident block
            in_specs=[
                pl.BlockSpec((C_in, Lx), lambda i: (0, 0)),
                pl.BlockSpec((KH * KW, C_out, C_in), lambda i: (0, 0, 0)),
                pl.BlockSpec((1, Lc), lambda i: (0, 0)),
                pl.BlockSpec((C_out, 1), lambda i: (0, 0)),
                pl.BlockSpec((C_out, 1), lambda i: (0, 0)),
            ],
            out_specs=pl.BlockSpec((C_out, Lc), lambda i: (0, 0)),
        ),
        compiler_params=pltpu.CompilerParams(
            dimension_semantics=("arbitrary",)),
    )(x_flat, w_taps, mask, gamma2d, beta2d)

    # (C_out, L) -> (C_out, N, Hp, Wp) -> strided valid window -> NCHW.
    y = out_t[:, :L].reshape(C_out, N, Hp, Wp)
    y = y[:, :, 0:(OH - 1) * stride + 1:stride, 0:(OW - 1) * stride + 1:stride]
    return jnp.transpose(y, (1, 0, 2, 3))


# ------------------------------ pure-JAX reference ---------------------------

def _reference(x, w, gamma, beta, *, stride, padding, dilation,
               eps=1e-5, slope=0.1):
    y = jax.lax.conv_general_dilated(
        x, w, window_strides=(stride, stride),
        padding=[(padding, padding), (padding, padding)],
        rhs_dilation=(dilation, dilation),
        dimension_numbers=("NCHW", "OIHW", "NCHW"),
        precision=jax.lax.Precision.HIGHEST)
    mean = jnp.mean(y, axis=(0, 2, 3), keepdims=True)
    var = jnp.mean((y - mean) ** 2, axis=(0, 2, 3), keepdims=True)
    yn = (y - mean) * jax.lax.rsqrt(var + eps)
    yn = yn * gamma.reshape(1, -1, 1, 1) + beta.reshape(1, -1, 1, 1)
    return jnp.where(yn >= 0, yn, slope * yn)


# ----------------------------------- main -------------------------------------

if __name__ == "__main__":
    # Module config: BasicConv2d(in_planes=4, out_planes=8, kernel_size=3, padding=1)
    in_planes, out_planes, ksize, stride, padding, dilation = 4, 8, 3, 1, 1, 1

    key = jax.random.PRNGKey(0)
    kx, kw_ = jax.random.split(key)

    x = jax.random.normal(kx, (2, in_planes, 16, 16), dtype=jnp.float32)
    conv_w = 0.1 * jax.random.normal(
        kw_, (out_planes, in_planes, ksize, ksize), dtype=jnp.float32)
    gamma = jnp.ones((out_planes,), dtype=jnp.float32)   # BN weight (PyTorch default init)
    beta = jnp.zeros((out_planes,), dtype=jnp.float32)   # BN bias   (PyTorch default init)

    fwd = jax.jit(lambda a, b, c, d: basic_conv2d(
        a, b, c, d, stride=stride, padding=padding, dilation=dilation))
    out = fwd(x, conv_w, gamma, beta)
    jax.block_until_ready(out)
    assert out.shape == (2, out_planes, 16, 16), out.shape

    # Sanity check against a pure-JAX reference of the same module (loose tol to
    # absorb MXU vs. XLA-conv rounding differences).
    ref = _reference(x, conv_w, gamma, beta,
                     stride=stride, padding=padding, dilation=dilation)
    max_err = float(jnp.max(jnp.abs(out - ref)))
    assert max_err < 3e-2, max_err

    print("KERNEL_OK")
</pallas_src>

<mosaic_0001>
module attributes {stable_mosaic.version = 11 : i64} {
  func.func @_fused_conv_bn_lrelu_kernel(%arg0: i32, %arg1: memref<4x896xf32, #tpu.memory_space<vmem>>, %arg2: memref<9x8x4xf32, #tpu.memory_space<vmem>>, %arg3: memref<1x768xf32, #tpu.memory_space<vmem>>, %arg4: memref<8x1xf32, #tpu.memory_space<vmem>>, %arg5: memref<8x1xf32, #tpu.memory_space<vmem>>, %arg6: memref<8x768xf32, #tpu.memory_space<vmem>>) attributes {dimension_semantics = [#tpu.dimension_semantics<arbitrary>], iteration_bounds = array<i64: 1>, scalar_prefetch = 0 : i64, scratch_operands = 0 : i64, tpu.core_type = #tpu.core_type<tc>, window_params = [{pipeline_mode = #tpu.pipeline_mode<synchronous>, transform_indices = @transform_0, window_bounds = array<i64: 4, 896>}, {pipeline_mode = #tpu.pipeline_mode<synchronous>, transform_indices = @transform_1, window_bounds = array<i64: 9, 8, 4>}, {pipeline_mode = #tpu.pipeline_mode<synchronous>, transform_indices = @transform_2, window_bounds = array<i64: 1, 768>}, {pipeline_mode = #tpu.pipeline_mode<synchronous>, transform_indices = @transform_3, window_bounds = array<i64: 8, 1>}, {pipeline_mode = #tpu.pipeline_mode<synchronous>, transform_indices = @transform_4, window_bounds = array<i64: 8, 1>}, {pipeline_mode = #tpu.pipeline_mode<synchronous>, transform_indices = @transform_5, window_bounds = array<i64: 8, 768>}]} {
    %c0 = arith.constant 0 : index
    %c0_0 = arith.constant 0 : index
    %0 = vector.load %arg1[%c0, %c0_0] : memref<4x896xf32, #tpu.memory_space<vmem>>, vector<4x768xf32>
    %c0_1 = arith.constant 0 : index
    %c0_2 = arith.constant 0 : index
    %c0_3 = arith.constant 0 : index
    %1 = vector.load %arg2[%c0_1, %c0_2, %c0_3] : memref<9x8x4xf32, #tpu.memory_space<vmem>>, vector<1x8x4xf32>
    %2 = vector.shape_cast %1 : vector<1x8x4xf32> to vector<8x4xf32>
    %cst = arith.constant dense<0.000000e+00> : vector<8x768xf32>
    %3 = tpu.matmul %2, %0, %cst {dimension_numbers = #tpu.dot_dimension_numbers<[1], [0], [0], [1], [0, 0, 1, 1], [], []>} : vector<8x4xf32>, vector<4x768xf32>, vector<8x768xf32> -> vector<8x768xf32>
    %c0_4 = arith.constant 0 : index
    %c1 = arith.constant 1 : index
    %4 = vector.load %arg1[%c0_4, %c1] : memref<4x896xf32, #tpu.memory_space<vmem>>, vector<4x768xf32>
    %c1_5 = arith.constant 1 : index
    %c0_6 = arith.constant 0 : index
    %c0_7 = arith.constant 0 : index
    %5 = vector.load %arg2[%c1_5, %c0_6, %c0_7] : memref<9x8x4xf32, #tpu.memory_space<vmem>>, vector<1x8x4xf32>
    %6 = vector.shape_cast %5 : vector<1x8x4xf32> to vector<8x4xf32>
    %cst_8 = arith.constant dense<0.000000e+00> : vector<8x768xf32>
    %7 = tpu.matmul %6, %4, %cst_8 {dimension_numbers = #tpu.dot_dimension_numbers<[1], [0], [0], [1], [0, 0, 1, 1], [], []>} : vector<8x4xf32>, vector<4x768xf32>, vector<8x768xf32> -> vector<8x768xf32>
    %8 = arith.addf %3, %7 : vector<8x768xf32>
    %c0_9 = arith.constant 0 : index
    %c2 = arith.constant 2 : index
    %9 = vector.load %arg1[%c0_9, %c2] : memref<4x896xf32, #tpu.memory_space<vmem>>, vector<4x768xf32>
    %c2_10 = arith.constant 2 : index
    %c0_11 = arith.constant 0 : index
    %c0_12 = arith.constant 0 : index
    %10 = vector.load %arg2[%c2_10, %c0_11, %c0_12] : memref<9x8x4xf32, #tpu.memory_space<vmem>>, vector<1x8x4xf32>
    %11 = vector.shape_cast %10 : vector<1x8x4xf32> to vector<8x4xf32>
    %cst_13 = arith.constant dense<0.000000e+00> : vector<8x768xf32>
    %12 = tpu.matmul %11, %9, %cst_13 {dimension_numbers = #tpu.dot_dimension_numbers<[1], [0], [0], [1], [0, 0, 1, 1], [], []>} : vector<8x4xf32>, vector<4x768xf32>, vector<8x768xf32> -> vector<8x768xf32>
    %13 = arith.addf %8, %12 : vector<8x768xf32>
    %c0_14 = arith.constant 0 : index
    %c18 = arith.constant 18 : index
    %14 = vector.load %arg1[%c0_14, %c18] : memref<4x896xf32, #tpu.memory_space<vmem>>, vector<4x768xf32>
    %c3 = arith.constant 3 : index
    %c0_15 = arith.constant 0 : index
    %c0_16 = arith.constant 0 : index
    %15 = vector.load %arg2[%c3, %c0_15, %c0_16] : memref<9x8x4xf32, #tpu.memory_space<vmem>>, vector<1x8x4xf32>
    %16 = vector.shape_cast %15 : vector<1x8x4xf32> to vector<8x4xf32>
    %cst_17 = arith.constant dense<0.000000e+00> : vector<8x768xf32>
    %17 = tpu.matmul %16, %14, %cst_17 {dimension_numbers = #tpu.dot_dimension_numbers<[1], [0], [0], [1], [0, 0, 1, 1], [], []>} : vector<8x4xf32>, vector<4x768xf32>, vector<8x768xf32> -> vector<8x768xf32>
    %18 = arith.addf %13, %17 : vector<8x768xf32>
    %c0_18 = arith.constant 0 : index
    %c19 = arith.constant 19 : index
    %19 = vector.load %arg1[%c0_18, %c19] : memref<4x896xf32, #tpu.memory_space<vmem>>, vector<4x768xf32>
    %c4 = arith.constant 4 : index
    %c0_19 = arith.constant 0 : index
    %c0_20 = arith.constant 0 : index
    %20 = vector.load %arg2[%c4, %c0_19, %c0_20] : memref<9x8x4xf32, #tpu.memory_space<vmem>>, vector<1x8x4xf32>
    %21 = vector.shape_cast %20 : vector<1x8x4xf32> to vector<8x4xf32>
    %cst_21 = arith.constant dense<0.000000e+00> : vector<8x768xf32>
    %22 = tpu.matmul %21, %19, %cst_21 {dimension_numbers = #tpu.dot_dimension_numbers<[1], [0], [0], [1], [0, 0, 1, 1], [], []>} : vector<8x4xf32>, vector<4x768xf32>, vector<8x768xf32> -> vector<8x768xf32>
    %23 = arith.addf %18, %22 : vector<8x768xf32>
    %c0_22 = arith.constant 0 : index
    %c20 = arith.constant 20 : index
    %24 = vector.load %arg1[%c0_22, %c20] : memref<4x896xf32, #tpu.memory_space<vmem>>, vector<4x768xf32>
    %c5 = arith.constant 5 : index
    %c0_23 = arith.constant 0 : index
    %c0_24 = arith.constant 0 : index
    %25 = vector.load %arg2[%c5, %c0_23, %c0_24] : memref<9x8x4xf32, #tpu.memory_space<vmem>>, vector<1x8x4xf32>
    %26 = vector.shape_cast %25 : vector<1x8x4xf32> to vector<8x4xf32>
    %cst_25 = arith.constant dense<0.000000e+00> : vector<8x768xf32>
    %27 = tpu.matmul %26, %24, %cst_25 {dimension_numbers = #tpu.dot_dimension_numbers<[1], [0], [0], [1], [0, 0, 1, 1], [], []>} : vector<8x4xf32>, vector<4x768xf32>, vector<8x768xf32> -> vector<8x768xf32>
    %28 = arith.addf %23, %27 : vector<8x768xf32>
    %c0_26 = arith.constant 0 : index
    %c36 = arith.constant 36 : index
    %29 = vector.load %arg1[%c0_26, %c36] : memref<4x896xf32, #tpu.memory_space<vmem>>, vector<4x768xf32>
    %c6 = arith.constant 6 : index
    %c0_27 = arith.constant 0 : index
    %c0_28 = arith.constant 0 : index
    %30 = vector.load %arg2[%c6, %c0_27, %c0_28] : memref<9x8x4xf32, #tpu.memory_space<vmem>>, vector<1x8x4xf32>
    %31 = vector.shape_cast %30 : vector<1x8x4xf32> to vector<8x4xf32>
    %cst_29 = arith.constant dense<0.000000e+00> : vector<8x768xf32>
    %32 = tpu.matmul %31, %29, %cst_29 {dimension_numbers = #tpu.dot_dimension_numbers<[1], [0], [0], [1], [0, 0, 1, 1], [], []>} : vector<8x4xf32>, vector<4x768xf32>, vector<8x768xf32> -> vector<8x768xf32>
    %33 = arith.addf %28, %32 : vector<8x768xf32>
    %c0_30 = arith.constant 0 : index
    %c37 = arith.constant 37 : index
    %34 = vector.load %arg1[%c0_30, %c37] : memref<4x896xf32, #tpu.memory_space<vmem>>, vector<4x768xf32>
    %c7 = arith.constant 7 : index
    %c0_31 = arith.constant 0 : index
    %c0_32 = arith.constant 0 : index
    %35 = vector.load %arg2[%c7, %c0_31, %c0_32] : memref<9x8x4xf32, #tpu.memory_space<vmem>>, vector<1x8x4xf32>
    %36 = vector.shape_cast %35 : vector<1x8x4xf32> to vector<8x4xf32>
    %cst_33 = arith.constant dense<0.000000e+00> : vector<8x768xf32>
    %37 = tpu.matmul %36, %34, %cst_33 {dimension_numbers = #tpu.dot_dimension_numbers<[1], [0], [0], [1], [0, 0, 1, 1], [], []>} : vector<8x4xf32>, vector<4x768xf32>, vector<8x768xf32> -> vector<8x768xf32>
    %38 = arith.addf %33, %37 : vector<8x768xf32>
    %c0_34 = arith.constant 0 : index
    %c38 = arith.constant 38 : index
    %39 = vector.load %arg1[%c0_34, %c38] : memref<4x896xf32, #tpu.memory_space<vmem>>, vector<4x768xf32>
    %c8 = arith.constant 8 : index
    %c0_35 = arith.constant 0 : index
    %c0_36 = arith.constant 0 : index
    %40 = vector.load %arg2[%c8, %c0_35, %c0_36] : memref<9x8x4xf32, #tpu.memory_space<vmem>>, vector<1x8x4xf32>
    %41 = vector.shape_cast %40 : vector<1x8x4xf32> to vector<8x4xf32>
    %cst_37 = arith.constant dense<0.000000e+00> : vector<8x768xf32>
    %42 = tpu.matmul %41, %39, %cst_37 {dimension_numbers = #tpu.dot_dimension_numbers<[1], [0], [0], [1], [0, 0, 1, 1], [], []>} : vector<8x4xf32>, vector<4x768xf32>, vector<8x768xf32> -> vector<8x768xf32>
    %43 = arith.addf %38, %42 : vector<8x768xf32>
    %c0_38 = arith.constant 0 : index
    %c0_39 = arith.constant 0 : index
    %44 = vector.load %arg3[%c0_38, %c0_39] : memref<1x768xf32, #tpu.memory_space<vmem>>, vector<1x768xf32>
    %45 = vector.broadcast %44 : vector<1x768xf32> to vector<8x768xf32>
    %46 = arith.mulf %43, %45 : vector<8x768xf32>
    %cst_40 = arith.constant dense<0.000000e+00> : vector<8xf32>
    %47 = vector.multi_reduction <add>, %46, %cst_40 [1] : vector<8x768xf32> to vector<8xf32>
    %48 = vector.shape_cast %47 : vector<8xf32> to vector<8x1xf32>
    %cst_41 = arith.constant 0.001953125 : f32
    %49 = vector.broadcast %cst_41 : f32 to vector<8x1xf32>
    %50 = arith.mulf %48, %49 : vector<8x1xf32>
    %51 = vector.broadcast %50 : vector<8x1xf32> to vector<8x768xf32>
    %52 = arith.subf %43, %51 : vector<8x768xf32>
    %53 = arith.mulf %52, %52 : vector<8x768xf32>
    %54 = vector.broadcast %44 : vector<1x768xf32> to vector<8x768xf32>
    %55 = arith.mulf %53, %54 : vector<8x768xf32>
    %cst_42 = arith.constant dense<0.000000e+00> : vector<8xf32>
    %56 = vector.multi_reduction <add>, %55, %cst_42 [1] : vector<8x768xf32> to vector<8xf32>
    %57 = vector.shape_cast %56 : vector<8xf32> to vector<8x1xf32>
    %cst_43 = arith.constant 0.001953125 : f32
    %58 = vector.broadcast %cst_43 : f32 to vector<8x1xf32>
    %59 = arith.mulf %57, %58 : vector<8x1xf32>
    %c0_44 = arith.constant 0 : index
    %c0_45 = arith.constant 0 : index
    %60 = vector.load %arg4[%c0_44, %c0_45] : memref<8x1xf32, #tpu.memory_space<vmem>>, vector<8x1xf32>
    %cst_46 = arith.constant 9.99999974E-6 : f32
    %61 = vector.broadcast %cst_46 : f32 to vector<8x1xf32>
    %62 = arith.addf %59, %61 : vector<8x1xf32>
    %63 = math.rsqrt %62 : vector<8x1xf32>
    %64 = arith.mulf %60, %63 : vector<8x1xf32>
    %c0_47 = arith.constant 0 : index
    %c0_48 = arith.constant 0 : index
    %65 = vector.load %arg5[%c0_47, %c0_48] : memref<8x1xf32, #tpu.memory_space<vmem>>, vector<8x1xf32>
    %66 = arith.mulf %50, %64 : vector<8x1xf32>
    %67 = arith.subf %65, %66 : vector<8x1xf32>
    %68 = vector.broadcast %64 : vector<8x1xf32> to vector<8x768xf32>
    %69 = arith.mulf %43, %68 : vector<8x768xf32>
    %70 = vector.broadcast %67 : vector<8x1xf32> to vector<8x768xf32>
    %71 = arith.addf %69, %70 : vector<8x768xf32>
    %cst_49 = arith.constant 0.000000e+00 : f32
    %72 = vector.broadcast %cst_49 : f32 to vector<8x768xf32>
    %73 = arith.cmpf oge, %71, %72 : vector<8x768xf32>
    %cst_50 = arith.constant 1.000000e-01 : f32
    %74 = vector.broadcast %cst_50 : f32 to vector<8x768xf32>
    %75 = arith.mulf %74, %71 : vector<8x768xf32>
    %76 = arith.select %73, %71, %75 : vector<8x768xi1>, vector<8x768xf32>
    %c0_51 = arith.constant 0 : index
    %c0_52 = arith.constant 0 : index
    %77 = vector.load %arg6[%c0_51, %c0_52] : memref<8x768xf32, #tpu.memory_space<vmem>>, vector<8x768xf32>
    tpu.vector_store %arg6[%c0_51, %c0_52], %76 {strides = array<i32>} : memref<8x768xf32, #tpu.memory_space<vmem>>, vector<8x768xf32>,
    return
  }
  func.func @transform_0(%arg0: i32) -> (i32, i32) {
    %c0_i32 = arith.constant 0 : i32
    %c0_i32_0 = arith.constant 0 : i32
    %c0_i32_1 = arith.constant 0 : i32
    return %c0_i32, %c0_i32_0 : i32, i32
  }
  func.func @transform_1(%arg0: i32) -> (i32, i32, i32) {
    %c0_i32 = arith.constant 0 : i32
    %c0_i32_0 = arith.constant 0 : i32
    %c0_i32_1 = arith.constant 0 : i32
    %c0_i32_2 = arith.constant 0 : i32
    return %c0_i32, %c0_i32_0, %c0_i32_1 : i32, i32, i32
  }
  func.func @transform_2(%arg0: i32) -> (i32, i32) {
    %c0_i32 = arith.constant 0 : i32
    %c0_i32_0 = arith.constant 0 : i32
    %c0_i32_1 = arith.constant 0 : i32
    return %c0_i32, %c0_i32_0 : i32, i32
  }
  func.func @transform_3(%arg0: i32) -> (i32, i32) {
    %c0_i32 = arith.constant 0 : i32
    %c0_i32_0 = arith.constant 0 : i32
    %c0_i32_1 = arith.constant 0 : i32
    return %c0_i32, %c0_i32_0 : i32, i32
  }
  func.func @transform_4(%arg0: i32) -> (i32, i32) {
    %c0_i32 = arith.constant 0 : i32
    %c0_i32_0 = arith.constant 0 : i32
    %c0_i32_1 = arith.constant 0 : i32
    return %c0_i32, %c0_i32_0 : i32, i32
  }
  func.func @transform_5(%arg0: i32) -> (i32, i32) {
    %c0_i32 = arith.constant 0 : i32
    %c0_i32_0 = arith.constant 0 : i32
    %c0_i32_1 = arith.constant 0 : i32
    return %c0_i32, %c0_i32_0 : i32, i32
  }
}

</mosaic_0001>

<llo_original>
// kernel: tile.7
$region0: #{tile.7}
  %s0 = inlined_call_operand.vmem [shape: f32[2,324], index: 0, kind: input, shape index: {}]
  %s1 = inlined_call_operand.vmem [shape: f32[648], index: 1, kind: output, shape index: {}]
  $region1: #{tile.7} parent=0
    #allocation0 [shape = 'u8[12288]{0}', space=vmem, size = 0x3000, scoped, tag = 'scoped mem for input reshape']
    %s3 = ssub.s32 4, 1
    %s4 = scalar_lea.vmem %s0, 4
    %v5 = vld [vmem:[%s4] sm:%s3]
    %s6 = scalar_lea.vmem [#allocation0], 16
    %7 = vst [vmem:[%s6] sm:%s3] %v5
    %s8 = scalar_lea.vmem %s0, 2
    %v9 = vld [vmem:[%s8] sm:%s3]
    %s10 = scalar_lea.vmem [#allocation0], 8
    %11 = vst [vmem:[%s10] sm:%s3] %v9
    %v12 = vld [vmem:[%s0] sm:%s3]
    %13 = vst [vmem:[#allocation0] sm:%s3] %v12
    %s14 = scalar_lea.vmem [#allocation0], 16
    %v15 = vld [vmem:[%s14] sm:$0x1]
    %vm16 = vcmask 556032
    %s17 = scalar_lea.vmem %s1, 2
    %18 = vst.msk [vmem:[%s17] sm:$0x1] %vm16, %v15
    %s19 = smov 3
    %v20 = vld [vmem:[#allocation0] ss:$8 sm:%s19]
    %21 = vst [vmem:[%s1] sm:$0x3] %v20
    %s22 = scalar_lea.vmem [#allocation0], 17
    %v23 = vld [vmem:[%s22] sm:$0x1]
    %s24 = scalar_lea.vmem [#allocation0], 1
    %v25 = vld [vmem:[%s24] ss:$8 sm:$0x7]
    %vm26 = vcmask 490496
    %v27 = vsel %vm26, %v25, %v23
    %28 = vrot.lane.b32.xlu0 %v27, 68
    %v29 = vpop.permute.xlu0 %28
    %vm30 = vcmask 64512
    %s31 = scalar_lea.vmem %s1, 5
    %32 = vst.msk [vmem:[%s31] sm:$0x1] %vm30, %v29
    %vm33 = vcmask 1048096
    %s34 = scalar_lea.vmem %s1, 2
    %35 = vst.msk [vmem:[%s34] sm:$0x7] %vm33, %v29
    %s36 = scalar_lea.vmem [#allocation0], 1
    %s37 = smov 3
    %v38 = vld [vmem:[%s36] ss:$8 sm:%s37]
    %39 = vrot.lane.b32.xlu0 %v38, 68
    %v40 = vpop.permute.xlu0 %39
    %vm41 = vcmask 556032
    %s42 = scalar_lea.vmem %s1, 3
    %43 = vst.msk [vmem:[%s42] sm:$0x3] %vm41, %v40

// kernel: tile.6
$region0: #{tile.6}
  #allocation0 [shape = 's32[1]{0}', space=sflag, size = 0x4, scoped, tag = 'scoped memory for tile.6']
  %s0 = inlined_call_operand.vmem [shape: f32[324], index: 0, kind: input, shape index: {}]
  %s1 = inlined_call_operand.vmem [shape: f32[2,324], index: 1, kind: output, shape index: {}]
  // Predicated region
  $region2: #{tile.6} parent=0 // pred_check
    _
  $region3: #{tile.6} parent=0 // pred_check_branch
    %3 = sbr.rel (0) target = $region5
  $region4: #{tile.6} parent=0 // pred_region
    _
  $region5: #{tile.6} parent=0 // pred_fallthru
    _
  %v4 = vld [vmem:[%s0] ss:$0 sm:$0xff]
  %5 = vst [vmem:[%s1] sm:$0x3] %v4
  %s6 = scalar_lea.vmem %s0, 1
  %v7 = vld [vmem:[%s6] ss:$0 sm:$0xff]
  %s8 = scalar_lea.vmem %s1, 2
  %9 = vst [vmem:[%s8] sm:$0x3] %v7
  %s10 = scalar_lea.vmem %s0, 2
  %v11 = vld [vmem:[%s10] ss:$0 sm:$0xff]
  %s12 = scalar_lea.vmem %s1, 4
  %13 = vst [vmem:[%s12] sm:$0x3] %v11

// kernel: _lambda_.1
$region0: #{_lambda_.1}
  #allocation0 [shape = 'u32[]', space=smem, size = 0x4, offset = 0x4, fixed_abs, tag = 'smem constant byte address 0x4 - core index']
  #allocation1 [shape = 'u32[72,128]{1,0:T(1,128)}', space=vmem, size = 0x9000, scoped, tag = 'internal scratch']
  %s0 = inlined_call_operand.vmem [shape: f32[4,896], index: 0, kind: input, shape index: {}]
  %s1 = inlined_call_operand.vmem [shape: f32[9,8,4], index: 1, kind: input, shape index: {}]
  %s2 = inlined_call_operand.vmem [shape: f32[1,768], index: 2, kind: input, shape index: {}]
  %s3 = inlined_call_operand.vmem [shape: f32[8,1], index: 3, kind: input, shape index: {}]
  %s4 = inlined_call_operand.vmem [shape: f32[8,1], index: 4, kind: input, shape index: {}]
  %s5 = inlined_call_operand.vmem [shape: f32[8,768], index: 5, kind: output, shape index: {}]
  %s6 = sld [smem:[#allocation0]]
  $region30: #{_lambda_.1} parent=0
    _
  %s8 = ssub.s32 1, %s6
  %s9 = scalar_select 0, %s8, %s6
  // Predicated region
  $region2: #{_lambda_.1} parent=0 // pred_check
    _
  $region3: #{_lambda_.1} parent=0 // pred_check_branch
    %11 = sbr.rel (0) target = $region5
  $region4: #{_lambda_.1} parent=0 // pred_region
    _
  $region5: #{_lambda_.1} parent=0 // pred_fallthru
    _
  // Predicated region
  $region6: #{_lambda_.1} parent=0 // pred_check
    _
  $region7: #{_lambda_.1} parent=0 // pred_check_branch
    %13 = sbr.rel (0) target = $region9
  $region8: #{_lambda_.1} parent=0 // pred_region
    _
  $region9: #{_lambda_.1} parent=0 // pred_fallthru
    _
  // Predicated region
  $region10: #{_lambda_.1} parent=0 // pred_check
    _
  $region11: #{_lambda_.1} parent=0 // pred_check_branch
    %15 = sbr.rel (0) target = $region13
  $region12: #{_lambda_.1} parent=0 // pred_region
    _
  $region13: #{_lambda_.1} parent=0 // pred_fallthru
    _
  // Predicated region
  $region14: #{_lambda_.1} parent=0 // pred_check
    _
  $region15: #{_lambda_.1} parent=0 // pred_check_branch
    %17 = sbr.rel (0) target = $region17
  $region16: #{_lambda_.1} parent=0 // pred_region
    _
  $region17: #{_lambda_.1} parent=0 // pred_fallthru
    _
  // Predicated region
  $region18: #{_lambda_.1} parent=0 // pred_check
    _
  $region19: #{_lambda_.1} parent=0 // pred_check_branch
    %19 = sbr.rel (0) target = $region21
  $region20: #{_lambda_.1} parent=0 // pred_region
    _
  $region21: #{_lambda_.1} parent=0 // pred_fallthru
    _
  %v20 = vld [vmem:[%s0] sm:$0xff]
  %v21 = vld [vmem:[%s0 + $0x8] sm:$0xff]
  %v22 = vld [vmem:[%s0 + $0x10] sm:$0xff]
  %v23 = vld [vmem:[%s1] sm:$0xff]
  %v24 = vld [vmem:[%s0] sm:$0xff]
  %v25 = vld [vmem:[%s0 + $0x8] sm:$0xff]
  %v26 = vld [vmem:[%s0 + $0x10] sm:$0xff]
  %v27 = vld [vmem:[%s0 + $0x18] sm:$0xf]
  %s28 = scalar_lea.vmem %s1, 8
  %v29 = vld [vmem:[%s28] sm:$0xff]
  %34 = vst [vmem:[#allocation1] ss:$2 sm:$0xff] %v24
  %s35 = scalar_lea.vmem [#allocation1], 16
  %36 = vst [vmem:[%s35] ss:$2 sm:$0xff] %v25
  %s37 = scalar_lea.vmem [#allocation1], 32
  %38 = vst [vmem:[%s37] ss:$2 sm:$0xff] %v26
  %s39 = scalar_lea.vmem [#allocation1], 48
  %40 = vst [vmem:[%s39] ss:$2 sm:$0xff] %v27
  %v41 = vld.sshfl [vmem:[#allocation1] sm:$0xff pattern:$0x75316420]
  %v42 = vld.sshfl [vmem:[#allocation1 + $0x8] sm:$0xff pattern:$0x75316420]
  %v43 = vld.sshfl [vmem:[#allocation1 + $0x10] sm:$0xff pattern:$0x75316420]
  %v44 = vld.sshfl [vmem:[#allocation1 + $0x18] sm:$0xff pattern:$0x75316420]
  %v45 = vld.sshfl [vmem:[#allocation1 + $0x20] sm:$0xff pattern:$0x75316420]
  %v46 = vld.sshfl [vmem:[#allocation1 + $0x28] sm:$0xff pattern:$0x75316420]
  %v47 = vld.sshfl [vmem:[#allocation1 + $0x30] sm:$0xff pattern:$0x75316420]
  %48 = vrot.lane.b32.xlu0 %v41, 127
  %v49 = vpop.permute.xlu0 %48
  %50 = vrot.lane.b32.xlu0 %v42, 127
  %v51 = vpop.permute.xlu0 %50
  %52 = vrot.lane.b32.xlu0 %v43, 127
  %v53 = vpop.permute.xlu0 %52
  %54 = vrot.lane.b32.xlu0 %v44, 127
  %v55 = vpop.permute.xlu0 %54
  %56 = vrot.lane.b32.xlu0 %v45, 127
  %v57 = vpop.permute.xlu0 %56
  %58 = vrot.lane.b32.xlu0 %v46, 127
  %v59 = vpop.permute.xlu0 %58
  %60 = vrot.lane.b32.xlu0 %v47, 127
  %v61 = vpop.permute.xlu0 %60
  %vm62 = vcmask 1039360
  %v63 = vsel %vm62, %v49, %v51
  %v64 = vsel %vm62, %v51, %v53
  %v65 = vsel %vm62, %v53, %v55
  %v66 = vsel %vm62, %v55, %v57
  %v67 = vsel %vm62, %v57, %v59
  %v68 = vsel %vm62, %v59, %v61
  %vm69 = vcmask 31744
  %v71 = vsel %vm69, %v29, 0
  %vm73 = vcmask 1043456
  %v74 = vsel %vm73, %v63, 0
  %v76 = vsel %vm73, %v64, 0
  %v78 = vsel %vm73, %v65, 0
  %v80 = vsel %vm73, %v66, 0
  %v82 = vsel %vm73, %v67, 0
  %v84 = vsel %vm73, %v68, 0
  %86 = vmatpush.msra.mxu0 0.0
  %87 = vmatpush.msra.mxu0 0.0
  %88 = vmatpush.msra.mxu0 0.0
  %89 = vmatpush.msra.mxu0 0.0
  %90 = vmatpush.msra.mxu0 0.0
  %91 = vmatpush.msra.mxu0 0.0
  %92 = vmatpush.msra.mxu0 0.0
  %93 = vmatpush.msra.mxu0 0.0
  %94 = vmatpush.msra.mxu0 0.0
  %95 = vmatpush.msra.mxu0 0.0
  %96 = vmatpush.msra.mxu0 0.0
  %97 = vmatpush.msra.mxu0 0.0
  %98 = vmatpush.msra.mxu0 0.0
  %99 = vmatpush.msra.mxu0 0.0
  %100 = vmatpush.msra.mxu0 0.0
  %101 = vmatpush.msra.mxu0 %v74
  %102 = vmatmul.f32.gmra.mxu0 %v71
  %v103 = vpop.f32.mrf.mxu0
  %v104 = vadd.f32 0.0, %v103
  %105 = vdwg.mxu0
  %106 = vmatpush.msra.mxu0 0.0
  %107 = vmatpush.msra.mxu0 0.0
  %108 = vmatpush.msra.mxu0 0.0
  %109 = vmatpush.msra.mxu0 0.0
  %110 = vmatpush.msra.mxu0 0.0
  %111 = vmatpush.msra.mxu0 0.0
  %112 = vmatpush.msra.mxu0 0.0
  %113 = vmatpush.msra.mxu0 0.0
  %114 = vmatpush.msra.mxu0 0.0
  %115 = vmatpush.msra.mxu0 0.0
  %116 = vmatpush.msra.mxu0 0.0
  %117 = vmatpush.msra.mxu0 0.0
  %118 = vmatpush.msra.mxu0 0.0
  %119 = vmatpush.msra.mxu0 0.0
  %120 = vmatpush.msra.mxu0 0.0
  %121 = vmatpush.msra.mxu0 %v76
  %122 = vmatmul.f32.gmra.mxu0 %v71
  %v123 = vpop.f32.mrf.mxu0
  %v124 = vadd.f32 0.0, %v123
  %125 = vdwg.mxu0
  %126 = vmatpush.msra.mxu0 0.0
  %127 = vmatpush.msra.mxu0 0.0
  %128 = vmatpush.msra.mxu0 0.0
  %129 = vmatpush.msra.mxu0 0.0
  %130 = vmatpush.msra.mxu0 0.0
  %131 = vmatpush.msra.mxu0 0.0
  %132 = vmatpush.msra.mxu0 0.0
  %133 = vmatpush.msra.mxu0 0.0
  %134 = vmatpush.msra.mxu0 0.0
  %135 = vmatpush.msra.mxu0 0.0
  %136 = vmatpush.msra.mxu0 0.0
  %137 = vmatpush.msra.mxu0 0.0
  %138 = vmatpush.msra.mxu0 0.0
  %139 = vmatpush.msra.mxu0 0.0
  %140 = vmatpush.msra.mxu0 0.0
  %141 = vmatpush.msra.mxu0 %v78
  %142 = vmatmul.f32.gmra.mxu0 %v71
  %v143 = vpop.f32.mrf.mxu0
  %v144 = vadd.f32 0.0, %v143
  %145 = vdwg.mxu0
  %146 = vmatpush.msra.mxu0 0.0
  %147 = vmatpush.msra.mxu0 0.0
  %148 = vmatpush.msra.mxu0 0.0
  %149 = vmatpush.msra.mxu0 0.0
  %150 = vmatpush.msra.mxu0 0.0
  %151 = vmatpush.msra.mxu0 0.0
  %152 = vmatpush.msra.mxu0 0.0
  %153 = vmatpush.msra.mxu0 0.0
  %154 = vmatpush.msra.mxu0 0.0
  %155 = vmatpush.msra.mxu0 0.0
  %156 = vmatpush.msra.mxu0 0.0
  %157 = vmatpush.msra.mxu0 0.0
  %158 = vmatpush.msra.mxu0 0.0
  %159 = vmatpush.msra.mxu0 0.0
  %160 = vmatpush.msra.mxu0 0.0
  %161 = vmatpush.msra.mxu0 %v80
  %162 = vmatmul.f32.gmra.mxu0 %v71
  %v163 = vpop.f32.mrf.mxu0
  %v164 = vadd.f32 0.0, %v163
  %165 = vdwg.mxu0
  %166 = vmatpush.msra.mxu0 0.0
  %167 = vmatpush.msra.mxu0 0.0
  %168 = vmatpush.msra.mxu0 0.0
  %169 = vmatpush.msra.mxu0 0.0
  %170 = vmatpush.msra.mxu0 0.0
  %171 = vmatpush.msra.mxu0 0.0
  %172 = vmatpush.msra.mxu0 0.0
  %173 = vmatpush.msra.mxu0 0.0
  %174 = vmatpush.msra.mxu0 0.0
  %175 = vmatpush.msra.mxu0 0.0
  %176 = vmatpush.msra.mxu0 0.0
  %177 = vmatpush.msra.mxu0 0.0
  %178 = vmatpush.msra.mxu0 0.0
  %179 = vmatpush.msra.mxu0 0.0
  %180 = vmatpush.msra.mxu0 0.0
  %181 = vmatpush.msra.mxu0 %v82
  %182 = vmatmul.f32.gmra.mxu0 %v71
  %v183 = vpop.f32.mrf.mxu0
  %v184 = vadd.f32 0.0, %v183
  %185 = vdwg.mxu0
  %186 = vmatpush.msra.mxu0 0.0
  %187 = vmatpush.msra.mxu0 0.0
  %188 = vmatpush.msra.mxu0 0.0
  %189 = vmatpush.msra.mxu0 0.0
  %190 = vmatpush.msra.mxu0 0.0
  %191 = vmatpush.msra.mxu0 0.0
  %192 = vmatpush.msra.mxu0 0.0
  %193 = vmatpush.msra.mxu0 0.0
  %194 = vmatpush.msra.mxu0 0.0
  %195 = vmatpush.msra.mxu0 0.0
  %196 = vmatpush.msra.mxu0 0.0
  %197 = vmatpush.msra.mxu0 0.0
  %198 = vmatpush.msra.mxu0 0.0
  %199 = vmatpush.msra.mxu0 0.0
  %200 = vmatpush.msra.mxu0 0.0
  %201 = vmatpush.msra.mxu0 %v84
  %202 = vmatmul.f32.gmra.mxu0 %v71
  %v203 = vpop.f32.mrf.mxu0
  %v204 = vadd.f32 0.0, %v203
  %205 = vdwg.mxu0
  %209 = vst [vmem:[#allocation1] ss:$2 sm:$0xff] %v20
  %s210 = scalar_lea.vmem [#allocation1], 16
  %211 = vst [vmem:[%s210] ss:$2 sm:$0xff] %v21
  %s212 = scalar_lea.vmem [#allocation1], 32
  %213 = vst [vmem:[%s212] ss:$2 sm:$0xff] %v22
  %v214 = vld.sshfl [vmem:[#allocation1] sm:$0xff pattern:$0x75316420]
  %v215 = vld.sshfl [vmem:[#allocation1 + $0x8] sm:$0xff pattern:$0x75316420]
  %v216 = vld.sshfl [vmem:[#allocation1 + $0x10] sm:$0xff pattern:$0x75316420]
  %v217 = vld.sshfl [vmem:[#allocation1 + $0x18] sm:$0xff pattern:$0x75316420]
  %v218 = vld.sshfl [vmem:[#allocation1 + $0x20] sm:$0xff pattern:$0x75316420]
  %v219 = vld.sshfl [vmem:[#allocation1 + $0x28] sm:$0xff pattern:$0x75316420]
  %v221 = vsel %vm69, %v23, 0
  %v223 = vsel %vm73, %v214, 0
  %v225 = vsel %vm73, %v215, 0
  %v227 = vsel %vm73, %v216, 0
  %v229 = vsel %vm73, %v217, 0
  %v231 = vsel %vm73, %v218, 0
  %v233 = vsel %vm73, %v219, 0
  %235 = vmatpush.msra.mxu0 0.0
  %236 = vmatpush.msra.mxu0 0.0
  %237 = vmatpush.msra.mxu0 0.0
  %238 = vmatpush.msra.mxu0 0.0
  %239 = vmatpush.msra.mxu0 0.0
  %240 = vmatpush.msra.mxu0 0.0
  %241 = vmatpush.msra.mxu0 0.0
  %242 = vmatpush.msra.mxu0 0.0
  %243 = vmatpush.msra.mxu0 0.0
  %244 = vmatpush.msra.mxu0 0.0
  %245 = vmatpush.msra.mxu0 0.0
  %246 = vmatpush.msra.mxu0 0.0
  %247 = vmatpush.msra.mxu0 0.0
  %248 = vmatpush.msra.mxu0 0.0
  %249 = vmatpush.msra.mxu0 0.0
  %250 = vmatpush.msra.mxu0 %v223
  %251 = vmatmul.f32.gmra.mxu0 %v221
  %v252 = vpop.f32.mrf.mxu0
  %v253 = vadd.f32 %v104, %v252
  %254 = vdwg.mxu0
  %255 = vmatpush.msra.mxu0 0.0
  %256 = vmatpush.msra.mxu0 0.0
  %257 = vmatpush.msra.mxu0 0.0
  %258 = vmatpush.msra.mxu0 0.0
  %259 = vmatpush.msra.mxu0 0.0
  %260 = vmatpush.msra.mxu0 0.0
  %261 = vmatpush.msra.mxu0 0.0
  %262 = vmatpush.msra.mxu0 0.0
  %263 = vmatpush.msra.mxu0 0.0
  %264 = vmatpush.msra.mxu0 0.0
  %265 = vmatpush.msra.mxu0 0.0
  %266 = vmatpush.msra.mxu0 0.0
  %267 = vmatpush.msra.mxu0 0.0
  %268 = vmatpush.msra.mxu0 0.0
  %269 = vmatpush.msra.mxu0 0.0
  %270 = vmatpush.msra.mxu0 %v225
  %271 = vmatmul.f32.gmra.mxu0 %v221
  %v272 = vpop.f32.mrf.mxu0
  %v273 = vadd.f32 %v124, %v272
  %274 = vdwg.mxu0
  %275 = vmatpush.msra.mxu0 0.0
  %276 = vmatpush.msra.mxu0 0.0
  %277 = vmatpush.msra.mxu0 0.0
  %278 = vmatpush.msra.mxu0 0.0
  %279 = vmatpush.msra.mxu0 0.0
  %280 = vmatpush.msra.mxu0 0.0
  %281 = vmatpush.msra.mxu0 0.0
  %282 = vmatpush.msra.mxu0 0.0
  %283 = vmatpush.msra.mxu0 0.0
  %284 = vmatpush.msra.mxu0 0.0
  %285 = vmatpush.msra.mxu0 0.0
  %286 = vmatpush.msra.mxu0 0.0
  %287 = vmatpush.msra.mxu0 0.0
  %288 = vmatpush.msra.mxu0 0.0
  %289 = vmatpush.msra.mxu0 0.0
  %290 = vmatpush.msra.mxu0 %v227
  %291 = vmatmul.f32.gmra.mxu0 %v221
  %v292 = vpop.f32.mrf.mxu0
  %v293 = vadd.f32 %v144, %v292
  %294 = vdwg.mxu0
  %295 = vmatpush.msra.mxu0 0.0
  %296 = vmatpush.msra.mxu0 0.0
  %297 = vmatpush.msra.mxu0 0.0
  %298 = vmatpush.msra.mxu0 0.0
  %299 = vmatpush.msra.mxu0 0.0
  %300 = vmatpush.msra.mxu0 0.0
  %301 = vmatpush.msra.mxu0 0.0
  %302 = vmatpush.msra.mxu0 0.0
  %303 = vmatpush.msra.mxu0 0.0
  %304 = vmatpush.msra.mxu0 0.0
  %305 = vmatpush.msra.mxu0 0.0
  %306 = vmatpush.msra.mxu0 0.0
  %307 = vmatpush.msra.mxu0 0.0
  %308 = vmatpush.msra.mxu0 0.0
  %309 = vmatpush.msra.mxu0 0.0
  %310 = vmatpush.msra.mxu0 %v229
  %311 = vmatmul.f32.gmra.mxu0 %v221
  %v312 = vpop.f32.mrf.mxu0
  %v313 = vadd.f32 %v164, %v312
  %314 = vdwg.mxu0
  %315 = vmatpush.msra.mxu0 0.0
  %316 = vmatpush.msra.mxu0 0.0
  %317 = vmatpush.msra.mxu0 0.0
  %318 = vmatpush.msra.mxu0 0.0
  %319 = vmatpush.msra.mxu0 0.0
  %320 = vmatpush.msra.mxu0 0.0
  %321 = vmatpush.msra.mxu0 0.0
  %322 = vmatpush.msra.mxu0 0.0
  %323 = vmatpush.msra.mxu0 0.0
  %324 = vmatpush.msra.mxu0 0.0
  %325 = vmatpush.msra.mxu0 0.0
  %326 = vmatpush.msra.mxu0 0.0
  %327 = vmatpush.msra.mxu0 0.0
  %328 = vmatpush.msra.mxu0 0.0
  %329 = vmatpush.msra.mxu0 0.0
  %330 = vmatpush.msra.mxu0 %v231
  %331 = vmatmul.f32.gmra.mxu0 %v221
  %v332 = vpop.f32.mrf.mxu0
  %v333 = vadd.f32 %v184, %v332
  %334 = vdwg.mxu0
  %335 = vmatpush.msra.mxu0 0.0
  %336 = vmatpush.msra.mxu0 0.0
  %337 = vmatpush.msra.mxu0 0.0
  %338 = vmatpush.msra.mxu0 0.0
  %339 = vmatpush.msra.mxu0 0.0
  %340 = vmatpush.msra.mxu0 0.0
  %341 = vmatpush.msra.mxu0 0.0
  %342 = vmatpush.msra.mxu0 0.0
  %343 = vmatpush.msra.mxu0 0.0
  %344 = vmatpush.msra.mxu0 0.0
  %345 = vmatpush.msra.mxu0 0.0
  %346 = vmatpush.msra.mxu0 0.0
  %347 = vmatpush.msra.mxu0 0.0
  %348 = vmatpush.msra.mxu0 0.0
  %349 = vmatpush.msra.mxu0 0.0
  %350 = vmatpush.msra.mxu0 %v233
  %351 = vmatmul.f32.gmra.mxu0 %v221
  %v352 = vpop.f32.mrf.mxu0
  %v353 = vadd.f32 %v204, %v352
  %354 = vdwg.mxu0
  %v355 = vld [vmem:[%s0] sm:$0xff]
  %v356 = vld [vmem:[%s0 + $0x8] sm:$0xff]
  %v357 = vld [vmem:[%s0 + $0x10] sm:$0xff]
  %v358 = vld [vmem:[%s0 + $0x18] sm:$0xf]
  %s359 = scalar_lea.vmem %s1, 16
  %v360 = vld [vmem:[%s359] sm:$0xff]
  %365 = vst [vmem:[#allocation1] ss:$2 sm:$0xff] %v355
  %s366 = scalar_lea.vmem [#allocation1], 16
  %367 = vst [vmem:[%s366] ss:$2 sm:$0xff] %v356
  %s368 = scalar_lea.vmem [#allocation1], 32
  %369 = vst [vmem:[%s368] ss:$2 sm:$0xff] %v357
  %s370 = scalar_lea.vmem [#allocation1], 48
  %371 = vst [vmem:[%s370] ss:$2 sm:$0xff] %v358
  %v372 = vld.sshfl [vmem:[#allocation1] sm:$0xff pattern:$0x75316420]
  %v373 = vld.sshfl [vmem:[#allocation1 + $0x8] sm:$0xff pattern:$0x75316420]
  %v374 = vld.sshfl [vmem:[#allocation1 + $0x10] sm:$0xff pattern:$0x75316420]
  %v375 = vld.sshfl [vmem:[#allocation1 + $0x18] sm:$0xff pattern:$0x75316420]
  %v376 = vld.sshfl [vmem:[#allocation1 + $0x20] sm:$0xff pattern:$0x75316420]
  %v377 = vld.sshfl [vmem:[#allocation1 + $0x28] sm:$0xff pattern:$0x75316420]
  %v378 = vld.sshfl [vmem:[#allocation1 + $0x30] sm:$0xff pattern:$0x75316420]
  %379 = vrot.lane.b32.xlu0 %v372, 126
  %v380 = vpop.permute.xlu0 %379
  %381 = vrot.lane.b32.xlu0 %v373, 126
  %v382 = vpop.permute.xlu0 %381
  %383 = vrot.lane.b32.xlu0 %v374, 126
  %v384 = vpop.permute.xlu0 %383
  %385 = vrot.lane.b32.xlu0 %v375, 126
  %v386 = vpop.permute.xlu0 %385
  %387 = vrot.lane.b32.xlu0 %v376, 126
  %v388 = vpop.permute.xlu0 %387
  %389 = vrot.lane.b32.xlu0 %v377, 126
  %v390 = vpop.permute.xlu0 %389
  %391 = vrot.lane.b32.xlu0 %v378, 126
  %v392 = vpop.permute.xlu0 %391
  %vm393 = vcmask 1031168
  %v394 = vsel %vm393, %v380, %v382
  %v395 = vsel %vm393, %v382, %v384
  %v396 = vsel %vm393, %v384, %v386
  %v397 = vsel %vm393, %v386, %v388
  %v398 = vsel %vm393, %v388, %v390
  %v399 = vsel %vm393, %v390, %v392
  %v401 = vsel %vm69, %v360, 0
  %v403 = vsel %vm73, %v394, 0
  %v405 = vsel %vm73, %v395, 0
  %v407 = vsel %vm73, %v396, 0
  %v409 = vsel %vm73, %v397, 0
  %v411 = vsel %vm73, %v398, 0
  %v413 = vsel %vm73, %v399, 0
  %415 = vmatpush.msra.mxu0 0.0
  %416 = vmatpush.msra.mxu0 0.0
  %417 = vmatpush.msra.mxu0 0.0
  %418 = vmatpush.msra.mxu0 0.0
  %419 = vmatpush.msra.mxu0 0.0
  %420 = vmatpush.msra.mxu0 0.0
  %421 = vmatpush.msra.mxu0 0.0
  %422 = vmatpush.msra.mxu0 0.0
  %423 = vmatpush.msra.mxu0 0.0
  %424 = vmatpush.msra.mxu0 0.0
  %425 = vmatpush.msra.mxu0 0.0
  %426 = vmatpush.msra.mxu0 0.0
  %427 = vmatpush.msra.mxu0 0.0
  %428 = vmatpush.msra.mxu0 0.0
  %429 = vmatpush.msra.mxu0 0.0
  %430 = vmatpush.msra.mxu0 %v403
  %431 = vmatmul.f32.gmra.mxu0 %v401
  %v432 = vpop.f32.mrf.mxu0
  %v433 = vadd.f32 0.0, %v432
  %434 = vdwg.mxu0
  %435 = vmatpush.msra.mxu0 0.0
  %436 = vmatpush.msra.mxu0 0.0
  %437 = vmatpush.msra.mxu0 0.0
  %438 = vmatpush.msra.mxu0 0.0
  %439 = vmatpush.msra.mxu0 0.0
  %440 = vmatpush.msra.mxu0 0.0
  %441 = vmatpush.msra.mxu0 0.0
  %442 = vmatpush.msra.mxu0 0.0
  %443 = vmatpush.msra.mxu0 0.0
  %444 = vmatpush.msra.mxu0 0.0
  %445 = vmatpush.msra.mxu0 0.0
  %446 = vmatpush.msra.mxu0 0.0
  %447 = vmatpush.msra.mxu0 0.0
  %448 = vmatpush.msra.mxu0 0.0
  %449 = vmatpush.msra.mxu0 0.0
  %450 = vmatpush.msra.mxu0 %v405
  %451 = vmatmul.f32.gmra.mxu0 %v401
  %v452 = vpop.f32.mrf.mxu0
  %v453 = vadd.f32 0.0, %v452
  %454 = vdwg.mxu0
  %455 = vmatpush.msra.mxu0 0.0
  %456 = vmatpush.msra.mxu0 0.0
  %457 = vmatpush.msra.mxu0 0.0
  %458 = vmatpush.msra.mxu0 0.0
  %459 = vmatpush.msra.mxu0 0.0
  %460 = vmatpush.msra.mxu0 0.0
  %461 = vmatpush.msra.mxu0 0.0
  %462 = vmatpush.msra.mxu0 0.0
  %463 = vmatpush.msra.mxu0 0.0
  %464 = vmatpush.msra.mxu0 0.0
  %465 = vmatpush.msra.mxu0 0.0
  %466 = vmatpush.msra.mxu0 0.0
  %467 = vmatpush.msra.mxu0 0.0
  %468 = vmatpush.msra.mxu0 0.0
  %469 = vmatpush.msra.mxu0 0.0
  %470 = vmatpush.msra.mxu0 %v407
  %471 = vmatmul.f32.gmra.mxu0 %v401
  %v472 = vpop.f32.mrf.mxu0
  %v473 = vadd.f32 0.0, %v472
  %474 = vdwg.mxu0
  %475 = vmatpush.msra.mxu0 0.0
  %476 = vmatpush.msra.mxu0 0.0
  %477 = vmatpush.msra.mxu0 0.0
  %478 = vmatpush.msra.mxu0 0.0
  %479 = vmatpush.msra.mxu0 0.0
  %480 = vmatpush.msra.mxu0 0.0
  %481 = vmatpush.msra.mxu0 0.0
  %482 = vmatpush.msra.mxu0 0.0
  %483 = vmatpush.msra.mxu0 0.0
  %484 = vmatpush.msra.mxu0 0.0
  %485 = vmatpush.msra.mxu0 0.0
  %486 = vmatpush.msra.mxu0 0.0
  %487 = vmatpush.msra.mxu0 0.0
  %488 = vmatpush.msra.mxu0 0.0
  %489 = vmatpush.msra.mxu0 0.0
  %490 = vmatpush.msra.mxu0 %v409
  %491 = vmatmul.f32.gmra.mxu0 %v401
  %v492 = vpop.f32.mrf.mxu0
  %v493 = vadd.f32 0.0, %v492
  %494 = vdwg.mxu0
  %495 = vmatpush.msra.mxu0 0.0
  %496 = vmatpush.msra.mxu0 0.0
  %497 = vmatpush.msra.mxu0 0.0
  %498 = vmatpush.msra.mxu0 0.0
  %499 = vmatpush.msra.mxu0 0.0
  %500 = vmatpush.msra.mxu0 0.0
  %501 = vmatpush.msra.mxu0 0.0
  %502 = vmatpush.msra.mxu0 0.0
  %503 = vmatpush.msra.mxu0 0.0
  %504 = vmatpush.msra.mxu0 0.0
  %505 = vmatpush.msra.mxu0 0.0
  %506 = vmatpush.msra.mxu0 0.0
  %507 = vmatpush.msra.mxu0 0.0
  %508 = vmatpush.msra.mxu0 0.0
  %509 = vmatpush.msra.mxu0 0.0
  %510 = vmatpush.msra.mxu0 %v411
  %511 = vmatmul.f32.gmra.mxu0 %v401
  %v512 = vpop.f32.mrf.mxu0
  %v513 = vadd.f32 0.0, %v512
  %514 = vdwg.mxu0
  %515 = vmatpush.msra.mxu0 0.0
  %516 = vmatpush.msra.mxu0 0.0
  %517 = vmatpush.msra.mxu0 0.0
  %518 = vmatpush.msra.mxu0 0.0
  %519 = vmatpush.msra.mxu0 0.0
  %520 = vmatpush.msra.mxu0 0.0
  %521 = vmatpush.msra.mxu0 0.0
  %522 = vmatpush.msra.mxu0 0.0
  %523 = vmatpush.msra.mxu0 0.0
  %524 = vmatpush.msra.mxu0 0.0
  %525 = vmatpush.msra.mxu0 0.0
  %526 = vmatpush.msra.mxu0 0.0
  %527 = vmatpush.msra.mxu0 0.0
  %528 = vmatpush.msra.mxu0 0.0
  %529 = vmatpush.msra.mxu0 0.0
  %530 = vmatpush.msra.mxu0 %v413
  %531 = vmatmul.f32.gmra.mxu0 %v401
  %v532 = vpop.f32.mrf.mxu0
  %v533 = vadd.f32 0.0, %v532
  %534 = vdwg.mxu0
  %v535 = vadd.f32 %v253, %v433
  %v536 = vadd.f32 %v273, %v453
  %v537 = vadd.f32 %v293, %v473
  %v538 = vadd.f32 %v313, %v493
  %v539 = vadd.f32 %v333, %v513
  %v540 = vadd.f32 %v353, %v533
  %v541 = vld [vmem:[%s0] sm:$0xff]
  %v542 = vld [vmem:[%s0 + $0x8] sm:$0xff]
  %v543 = vld [vmem:[%s0 + $0x10] sm:$0xff]
  %v544 = vld [vmem:[%s0 + $0x18] sm:$0xf]
  %s545 = scalar_lea.vmem %s1, 24
  %v546 = vld [vmem:[%s545] sm:$0xff]
  %551 = vst [vmem:[#allocation1] ss:$2 sm:$0xff] %v541
  %s552 = scalar_lea.vmem [#allocation1], 16
  %553 = vst [vmem:[%s552] ss:$2 sm:$0xff] %v542
  %s554 = scalar_lea.vmem [#allocation1], 32
  %555 = vst [vmem:[%s554] ss:$2 sm:$0xff] %v543
  %s556 = scalar_lea.vmem [#allocation1], 48
  %557 = vst [vmem:[%s556] ss:$2 sm:$0xff] %v544
  %v558 = vld.sshfl [vmem:[#allocation1] sm:$0xff pattern:$0x75316420]
  %v559 = vld.sshfl [vmem:[#allocation1 + $0x8] sm:$0xff pattern:$0x75316420]
  %v560 = vld.sshfl [vmem:[#allocation1 + $0x10] sm:$0xff pattern:$0x75316420]
  %v561 = vld.sshfl [vmem:[#allocation1 + $0x18] sm:$0xff pattern:$0x75316420]
  %v562 = vld.sshfl [vmem:[#allocation1 + $0x20] sm:$0xff pattern:$0x75316420]
  %v563 = vld.sshfl [vmem:[#allocation1 + $0x28] sm:$0xff pattern:$0x75316420]
  %v564 = vld.sshfl [vmem:[#allocation1 + $0x30] sm:$0xff pattern:$0x75316420]
  %565 = vrot.lane.b32.xlu0 %v558, 110
  %v566 = vpop.permute.xlu0 %565
  %567 = vrot.lane.b32.xlu0 %v559, 110
  %v568 = vpop.permute.xlu0 %567
  %569 = vrot.lane.b32.xlu0 %v560, 110
  %v570 = vpop.permute.xlu0 %569
  %571 = vrot.lane.b32.xlu0 %v561, 110
  %v572 = vpop.permute.xlu0 %571
  %573 = vrot.lane.b32.xlu0 %v562, 110
  %v574 = vpop.permute.xlu0 %573
  %575 = vrot.lane.b32.xlu0 %v563, 110
  %v576 = vpop.permute.xlu0 %575
  %577 = vrot.lane.b32.xlu0 %v564, 110
  %v578 = vpop.permute.xlu0 %577
  %vm579 = vcmask 900096
  %v580 = vsel %vm579, %v566, %v568
  %v581 = vsel %vm579, %v568, %v570
  %v582 = vsel %vm579, %v570, %v572
  %v583 = vsel %vm579, %v572, %v574
  %v584 = vsel %vm579, %v574, %v576
  %v585 = vsel %vm579, %v576, %v578
  %v587 = vsel %vm69, %v546, 0
  %v589 = vsel %vm73, %v580, 0
  %v591 = vsel %vm73, %v581, 0
  %v593 = vsel %vm73, %v582, 0
  %v595 = vsel %vm73, %v583, 0
  %v597 = vsel %vm73, %v584, 0
  %v599 = vsel %vm73, %v585, 0
  %601 = vmatpush.msra.mxu0 0.0
  %602 = vmatpush.msra.mxu0 0.0
  %603 = vmatpush.msra.mxu0 0.0
  %604 = vmatpush.msra.mxu0 0.0
  %605 = vmatpush.msra.mxu0 0.0
  %606 = vmatpush.msra.mxu0 0.0
  %607 = vmatpush.msra.mxu0 0.0
  %608 = vmatpush.msra.mxu0 0.0
  %609 = vmatpush.msra.mxu0 0.0
  %610 = vmatpush.msra.mxu0 0.0
  %611 = vmatpush.msra.mxu0 0.0
  %612 = vmatpush.msra.mxu0 0.0
  %613 = vmatpush.msra.mxu0 0.0
  %614 = vmatpush.msra.mxu0 0.0
  %615 = vmatpush.msra.mxu0 0.0
  %616 = vmatpush.msra.mxu0 %v589
  %617 = vmatmul.f32.gmra.mxu0 %v587
  %v618 = vpop.f32.mrf.mxu0
  %v619 = vadd.f32 0.0, %v618
  %620 = vdwg.mxu0
  %621 = vmatpush.msra.mxu0 0.0
  %622 = vmatpush.msra.mxu0 0.0
  %623 = vmatpush.msra.mxu0 0.0
  %624 = vmatpush.msra.mxu0 0.0
  %625 = vmatpush.msra.mxu0 0.0
  %626 = vmatpush.msra.mxu0 0.0
  %627 = vmatpush.msra.mxu0 0.0
  %628 = vmatpush.msra.mxu0 0.0
  %629 = vmatpush.msra.mxu0 0.0
  %630 = vmatpush.msra.mxu0 0.0
  %631 = vmatpush.msra.mxu0 0.0
  %632 = vmatpush.msra.mxu0 0.0
  %633 = vmatpush.msra.mxu0 0.0
  %634 = vmatpush.msra.mxu0 0.0
  %635 = vmatpush.msra.mxu0 0.0
  %636 = vmatpush.msra.mxu0 %v591
  %637 = vmatmul.f32.gmra.mxu0 %v587
  %v638 = vpop.f32.mrf.mxu0
  %v639 = vadd.f32 0.0, %v638
  %640 = vdwg.mxu0
  %641 = vmatpush.msra.mxu0 0.0
  %642 = vmatpush.msra.mxu0 0.0
  %643 = vmatpush.msra.mxu0 0.0
  %644 = vmatpush.msra.mxu0 0.0
  %645 = vmatpush.msra.mxu0 0.0
  %646 = vmatpush.msra.mxu0 0.0
  %647 = vmatpush.msra.mxu0 0.0
  %648 = vmatpush.msra.mxu0 0.0
  %649 = vmatpush.msra.mxu0 0.0
  %650 = vmatpush.msra.mxu0 0.0
  %651 = vmatpush.msra.mxu0 0.0
  %652 = vmatpush.msra.mxu0 0.0
  %653 = vmatpush.msra.mxu0 0.0
  %654 = vmatpush.msra.mxu0 0.0
  %655 = vmatpush.msra.mxu0 0.0
  %656 = vmatpush.msra.mxu0 %v593
  %657 = vmatmul.f32.gmra.mxu0 %v587
  %v658 = vpop.f32.mrf.mxu0
  %v659 = vadd.f32 0.0, %v658
  %660 = vdwg.mxu0
  %661 = vmatpush.msra.mxu0 0.0
  %662 = vmatpush.msra.mxu0 0.0
  %663 = vmatpush.msra.mxu0 0.0
  %664 = vmatpush.msra.mxu0 0.0
  %665 = vmatpush.msra.mxu0 0.0
  %666 = vmatpush.msra.mxu0 0.0
  %667 = vmatpush.msra.mxu0 0.0
  %668 = vmatpush.msra.mxu0 0.0
  %669 = vmatpush.msra.mxu0 0.0
  %670 = vmatpush.msra.mxu0 0.0
  %671 = vmatpush.msra.mxu0 0.0
  %672 = vmatpush.msra.mxu0 0.0
  %673 = vmatpush.msra.mxu0 0.0
  %674 = vmatpush.msra.mxu0 0.0
  %675 = vmatpush.msra.mxu0 0.0
  %676 = vmatpush.msra.mxu0 %v595
  %677 = vmatmul.f32.gmra.mxu0 %v587
  %v678 = vpop.f32.mrf.mxu0
  %v679 = vadd.f32 0.0, %v678
  %680 = vdwg.mxu0
  %681 = vmatpush.msra.mxu0 0.0
  %682 = vmatpush.msra.mxu0 0.0
  %683 = vmatpush.msra.mxu0 0.0
  %684 = vmatpush.msra.mxu0 0.0
  %685 = vmatpush.msra.mxu0 0.0
  %686 = vmatpush.msra.mxu0 0.0
  %687 = vmatpush.msra.mxu0 0.0
  %688 = vmatpush.msra.mxu0 0.0
  %689 = vmatpush.msra.mxu0 0.0
  %690 = vmatpush.msra.mxu0 0.0
  %691 = vmatpush.msra.mxu0 0.0
  %692 = vmatpush.msra.mxu0 0.0
  %693 = vmatpush.msra.mxu0 0.0
  %694 = vmatpush.msra.mxu0 0.0
  %695 = vmatpush.msra.mxu0 0.0
  %696 = vmatpush.msra.mxu0 %v597
  %697 = vmatmul.f32.gmra.mxu0 %v587
  %v698 = vpop.f32.mrf.mxu0
  %v699 = vadd.f32 0.0, %v698
  %700 = vdwg.mxu0
  %701 = vmatpush.msra.mxu0 0.0
  %702 = vmatpush.msra.mxu0 0.0
  %703 = vmatpush.msra.mxu0 0.0
  %704 = vmatpush.msra.mxu0 0.0
  %705 = vmatpush.msra.mxu0 0.0
  %706 = vmatpush.msra.mxu0 0.0
  %707 = vmatpush.msra.mxu0 0.0
  %708 = vmatpush.msra.mxu0 0.0
  %709 = vmatpush.msra.mxu0 0.0
  %710 = vmatpush.msra.mxu0 0.0
  %711 = vmatpush.msra.mxu0 0.0
  %712 = vmatpush.msra.mxu0 0.0
  %713 = vmatpush.msra.mxu0 0.0
  %714 = vmatpush.msra.mxu0 0.0
  %715 = vmatpush.msra.mxu0 0.0
  %716 = vmatpush.msra.mxu0 %v599
  %717 = vmatmul.f32.gmra.mxu0 %v587
  %v718 = vpop.f32.mrf.mxu0
  %v719 = vadd.f32 0.0, %v718
  %720 = vdwg.mxu0
  %v721 = vadd.f32 %v535, %v619
  %v722 = vadd.f32 %v536, %v639
  %v723 = vadd.f32 %v537, %v659
  %v724 = vadd.f32 %v538, %v679
  %v725 = vadd.f32 %v539, %v699
  %v726 = vadd.f32 %v540, %v719
  %v727 = vld [vmem:[%s0] sm:$0xff]
  %v728 = vld [vmem:[%s0 + $0x8] sm:$0xff]
  %v729 = vld [vmem:[%s0 + $0x10] sm:$0xff]
  %v730 = vld [vmem:[%s0 + $0x18] sm:$0xf]
  %s731 = scalar_lea.vmem %s1, 32
  %v732 = vld [vmem:[%s731] sm:$0xff]
  %737 = vst [vmem:[#allocation1] ss:$2 sm:$0xff] %v727
  %s738 = scalar_lea.vmem [#allocation1], 16
  %739 = vst [vmem:[%s738] ss:$2 sm:$0xff] %v728
  %s740 = scalar_lea.vmem [#allocation1], 32
  %741 = vst [vmem:[%s740] ss:$2 sm:$0xff] %v729
  %s742 = scalar_lea.vmem [#allocation1], 48
  %743 = vst [vmem:[%s742] ss:$2 sm:$0xff] %v730
  %v744 = vld.sshfl [vmem:[#allocation1] sm:$0xff pattern:$0x75316420]
  %v745 = vld.sshfl [vmem:[#allocation1 + $0x8] sm:$0xff pattern:$0x75316420]
  %v746 = vld.sshfl [vmem:[#allocation1 + $0x10] sm:$0xff pattern:$0x75316420]
  %v747 = vld.sshfl [vmem:[#allocation1 + $0x18] sm:$0xff pattern:$0x75316420]
  %v748 = vld.sshfl [vmem:[#allocation1 + $0x20] sm:$0xff pattern:$0x75316420]
  %v749 = vld.sshfl [vmem:[#allocation1 + $0x28] sm:$0xff pattern:$0x75316420]
  %v750 = vld.sshfl [vmem:[#allocation1 + $0x30] sm:$0xff pattern:$0x75316420]
  %751 = vrot.lane.b32.xlu0 %v744, 109
  %v752 = vpop.permute.xlu0 %751
  %753 = vrot.lane.b32.xlu0 %v745, 109
  %v754 = vpop.permute.xlu0 %753
  %755 = vrot.lane.b32.xlu0 %v746, 109
  %v756 = vpop.permute.xlu0 %755
  %757 = vrot.lane.b32.xlu0 %v747, 109
  %v758 = vpop.permute.xlu0 %757
  %759 = vrot.lane.b32.xlu0 %v748, 109
  %v760 = vpop.permute.xlu0 %759
  %761 = vrot.lane.b32.xlu0 %v749, 109
  %v762 = vpop.permute.xlu0 %761
  %763 = vrot.lane.b32.xlu0 %v750, 109
  %v764 = vpop.permute.xlu0 %763
  %vm765 = vcmask 891904
  %v766 = vsel %vm765, %v752, %v754
  %v767 = vsel %vm765, %v754, %v756
  %v768 = vsel %vm765, %v756, %v758
  %v769 = vsel %vm765, %v758, %v760
  %v770 = vsel %vm765, %v760, %v762
  %v771 = vsel %vm765, %v762, %v764
  %v773 = vsel %vm69, %v732, 0
  %v775 = vsel %vm73, %v766, 0
  %v777 = vsel %vm73, %v767, 0
  %v779 = vsel %vm73, %v768, 0
  %v781 = vsel %vm73, %v769, 0
  %v783 = vsel %vm73, %v770, 0
  %v785 = vsel %vm73, %v771, 0
  %787 = vmatpush.msra.mxu0 0.0
  %788 = vmatpush.msra.mxu0 0.0
  %789 = vmatpush.msra.mxu0 0.0
  %790 = vmatpush.msra.mxu0 0.0
  %791 = vmatpush.msra.mxu0 0.0
  %792 = vmatpush.msra.mxu0 0.0
  %793 = vmatpush.msra.mxu0 0.0
  %794 = vmatpush.msra.mxu0 0.0
  %795 = vmatpush.msra.mxu0 0.0
  %796 = vmatpush.msra.mxu0 0.0
  %797 = vmatpush.msra.mxu0 0.0
  %798 = vmatpush.msra.mxu0 0.0
  %799 = vmatpush.msra.mxu0 0.0
  %800 = vmatpush.msra.mxu0 0.0
  %801 = vmatpush.msra.mxu0 0.0
  %802 = vmatpush.msra.mxu0 %v775
  %803 = vmatmul.f32.gmra.mxu0 %v773
  %v804 = vpop.f32.mrf.mxu0
  %v805 = vadd.f32 0.0, %v804
  %806 = vdwg.mxu0
  %807 = vmatpush.msra.mxu0 0.0
  %808 = vmatpush.msra.mxu0 0.0
  %809 = vmatpush.msra.mxu0 0.0
  %810 = vmatpush.msra.mxu0 0.0
  %811 = vmatpush.msra.mxu0 0.0
  %812 = vmatpush.msra.mxu0 0.0
  %813 = vmatpush.msra.mxu0 0.0
  %814 = vmatpush.msra.mxu0 0.0
  %815 = vmatpush.msra.mxu0 0.0
  %816 = vmatpush.msra.mxu0 0.0
  %817 = vmatpush.msra.mxu0 0.0
  %818 = vmatpush.msra.mxu0 0.0
  %819 = vmatpush.msra.mxu0 0.0
  %820 = vmatpush.msra.mxu0 0.0
  %821 = vmatpush.msra.mxu0 0.0
  %822 = vmatpush.msra.mxu0 %v777
  %823 = vmatmul.f32.gmra.mxu0 %v773
  %v824 = vpop.f32.mrf.mxu0
  %v825 = vadd.f32 0.0, %v824
  %826 = vdwg.mxu0
  %827 = vmatpush.msra.mxu0 0.0
  %828 = vmatpush.msra.mxu0 0.0
  %829 = vmatpush.msra.mxu0 0.0
  %830 = vmatpush.msra.mxu0 0.0
  %831 = vmatpush.msra.mxu0 0.0
  %832 = vmatpush.msra.mxu0 0.0
  %833 = vmatpush.msra.mxu0 0.0
  %834 = vmatpush.msra.mxu0 0.0
  %835 = vmatpush.msra.mxu0 0.0
  %836 = vmatpush.msra.mxu0 0.0
  %837 = vmatpush.msra.mxu0 0.0
  %838 = vmatpush.msra.mxu0 0.0
  %839 = vmatpush.msra.mxu0 0.0
  %840 = vmatpush.msra.mxu0 0.0
  %841 = vmatpush.msra.mxu0 0.0
  %842 = vmatpush.msra.mxu0 %v779
  %843 = vmatmul.f32.gmra.mxu0 %v773
  %v844 = vpop.f32.mrf.mxu0
  %v845 = vadd.f32 0.0, %v844
  %846 = vdwg.mxu0
  %847 = vmatpush.msra.mxu0 0.0
  %848 = vmatpush.msra.mxu0 0.0
  %849 = vmatpush.msra.mxu0 0.0
  %850 = vmatpush.msra.mxu0 0.0
  %851 = vmatpush.msra.mxu0 0.0
  %852 = vmatpush.msra.mxu0 0.0
  %853 = vmatpush.msra.mxu0 0.0
  %854 = vmatpush.msra.mxu0 0.0
  %855 = vmatpush.msra.mxu0 0.0
  %856 = vmatpush.msra.mxu0 0.0
  %857 = vmatpush.msra.mxu0 0.0
  %858 = vmatpush.msra.mxu0 0.0
  %859 = vmatpush.msra.mxu0 0.0
  %860 = vmatpush.msra.mxu0 0.0
  %861 = vmatpush.msra.mxu0 0.0
  %862 = vmatpush.msra.mxu0 %v781
  %863 = vmatmul.f32.gmra.mxu0 %v773
  %v864 = vpop.f32.mrf.mxu0
  %v865 = vadd.f32 0.0, %v864
  %866 = vdwg.mxu0
  %867 = vmatpush.msra.mxu0 0.0
  %868 = vmatpush.msra.mxu0 0.0
  %869 = vmatpush.msra.mxu0 0.0
  %870 = vmatpush.msra.mxu0 0.0
  %871 = vmatpush.msra.mxu0 0.0
  %872 = vmatpush.msra.mxu0 0.0
  %873 = vmatpush.msra.mxu0 0.0
  %874 = vmatpush.msra.mxu0 0.0
  %875 = vmatpush.msra.mxu0 0.0
  %876 = vmatpush.msra.mxu0 0.0
  %877 = vmatpush.msra.mxu0 0.0
  %878 = vmatpush.msra.mxu0 0.0
  %879 = vmatpush.msra.mxu0 0.0
  %880 = vmatpush.msra.mxu0 0.0
  %881 = vmatpush.msra.mxu0 0.0
  %882 = vmatpush.msra.mxu0 %v783
  %883 = vmatmul.f32.gmra.mxu0 %v773
  %v884 = vpop.f32.mrf.mxu0
  %v885 = vadd.f32 0.0, %v884
  %886 = vdwg.mxu0
  %887 = vmatpush.msra.mxu0 0.0
  %888 = vmatpush.msra.mxu0 0.0
  %889 = vmatpush.msra.mxu0 0.0
  %890 = vmatpush.msra.mxu0 0.0
  %891 = vmatpush.msra.mxu0 0.0
  %892 = vmatpush.msra.mxu0 0.0
  %893 = vmatpush.msra.mxu0 0.0
  %894 = vmatpush.msra.mxu0 0.0
  %895 = vmatpush.msra.mxu0 0.0
  %896 = vmatpush.msra.mxu0 0.0
  %897 = vmatpush.msra.mxu0 0.0
  %898 = vmatpush.msra.mxu0 0.0
  %899 = vmatpush.msra.mxu0 0.0
  %900 = vmatpush.msra.mxu0 0.0
  %901 = vmatpush.msra.mxu0 0.0
  %902 = vmatpush.msra.mxu0 %v785
  %903 = vmatmul.f32.gmra.mxu0 %v773
  %v904 = vpop.f32.mrf.mxu0
  %v905 = vadd.f32 0.0, %v904
  %906 = vdwg.mxu0
  %v907 = vadd.f32 %v721, %v805
  %v908 = vadd.f32 %v722, %v825
  %v909 = vadd.f32 %v723, %v845
  %v910 = vadd.f32 %v724, %v865
  %v911 = vadd.f32 %v725, %v885
  %v912 = vadd.f32 %v726, %v905
  %v913 = vld [vmem:[%s0] sm:$0xff]
  %v914 = vld [vmem:[%s0 + $0x8] sm:$0xff]
  %v915 = vld [vmem:[%s0 + $0x10] sm:$0xff]
  %v916 = vld [vmem:[%s0 + $0x18] sm:$0xf]
  %s917 = scalar_lea.vmem %s1, 40
  %v918 = vld [vmem:[%s917] sm:$0xff]
  %923 = vst [vmem:[#allocation1] ss:$2 sm:$0xff] %v913
  %s924 = scalar_lea.vmem [#allocation1], 16
  %925 = vst [vmem:[%s924] ss:$2 sm:$0xff] %v914
  %s926 = scalar_lea.vmem [#allocation1], 32
  %927 = vst [vmem:[%s926] ss:$2 sm:$0xff] %v915
  %s928 = scalar_lea.vmem [#allocation1], 48
  %929 = vst [vmem:[%s928] ss:$2 sm:$0xff] %v916
  %v930 = vld.sshfl [vmem:[#allocation1] sm:$0xff pattern:$0x75316420]
  %v931 = vld.sshfl [vmem:[#allocation1 + $0x8] sm:$0xff pattern:$0x75316420]
  %v932 = vld.sshfl [vmem:[#allocation1 + $0x10] sm:$0xff pattern:$0x75316420]
  %v933 = vld.sshfl [vmem:[#allocation1 + $0x18] sm:$0xff pattern:$0x75316420]
  %v934 = vld.sshfl [vmem:[#allocation1 + $0x20] sm:$0xff pattern:$0x75316420]
  %v935 = vld.sshfl [vmem:[#allocation1 + $0x28] sm:$0xff pattern:$0x75316420]
  %v936 = vld.sshfl [vmem:[#allocation1 + $0x30] sm:$0xff pattern:$0x75316420]
  %937 = vrot.lane.b32.xlu0 %v930, 108
  %v938 = vpop.permute.xlu0 %937
  %939 = vrot.lane.b32.xlu0 %v931, 108
  %v940 = vpop.permute.xlu0 %939
  %941 = vrot.lane.b32.xlu0 %v932, 108
  %v942 = vpop.permute.xlu0 %941
  %943 = vrot.lane.b32.xlu0 %v933, 108
  %v944 = vpop.permute.xlu0 %943
  %945 = vrot.lane.b32.xlu0 %v934, 108
  %v946 = vpop.permute.xlu0 %945
  %947 = vrot.lane.b32.xlu0 %v935, 108
  %v948 = vpop.permute.xlu0 %947
  %949 = vrot.lane.b32.xlu0 %v936, 108
  %v950 = vpop.permute.xlu0 %949
  %vm951 = vcmask 883712
  %v952 = vsel %vm951, %v938, %v940
  %v953 = vsel %vm951, %v940, %v942
  %v954 = vsel %vm951, %v942, %v944
  %v955 = vsel %vm951, %v944, %v946
  %v956 = vsel %vm951, %v946, %v948
  %v957 = vsel %vm951, %v948, %v950
  %v959 = vsel %vm69, %v918, 0
  %v961 = vsel %vm73, %v952, 0
  %v963 = vsel %vm73, %v953, 0
  %v965 = vsel %vm73, %v954, 0
  %v967 = vsel %vm73, %v955, 0
  %v969 = vsel %vm73, %v956, 0
  %v971 = vsel %vm73, %v957, 0
  %973 = vmatpush.msra.mxu0 0.0
  %974 = vmatpush.msra.mxu0 0.0
  %975 = vmatpush.msra.mxu0 0.0
  %976 = vmatpush.msra.mxu0 0.0
  %977 = vmatpush.msra.mxu0 0.0
  %978 = vmatpush.msra.mxu0 0.0
  %979 = vmatpush.msra.mxu0 0.0
  %980 = vmatpush.msra.mxu0 0.0
  %981 = vmatpush.msra.mxu0 0.0
  %982 = vmatpush.msra.mxu0 0.0
  %983 = vmatpush.msra.mxu0 0.0
  %984 = vmatpush.msra.mxu0 0.0
  %985 = vmatpush.msra.mxu0 0.0
  %986 = vmatpush.msra.mxu0 0.0
  %987 = vmatpush.msra.mxu0 0.0
  %988 = vmatpush.msra.mxu0 %v961
  %989 = vmatmul.f32.gmra.mxu0 %v959
  %v990 = vpop.f32.mrf.mxu0
  %v991 = vadd.f32 0.0, %v990
  %992 = vdwg.mxu0
  %993 = vmatpush.msra.mxu0 0.0
  %994 = vmatpush.msra.mxu0 0.0
  %995 = vmatpush.msra.mxu0 0.0
  %996 = vmatpush.msra.mxu0 0.0
  %997 = vmatpush.msra.mxu0 0.0
  %998 = vmatpush.msra.mxu0 0.0
  %999 = vmatpush.msra.mxu0 0.0
  %1000 = vmatpush.msra.mxu0 0.0
  %1001 = vmatpush.msra.mxu0 0.0
  %1002 = vmatpush.msra.mxu0 0.0
  %1003 = vmatpush.msra.mxu0 0.0
  %1004 = vmatpush.msra.mxu0 0.0
  %1005 = vmatpush.msra.mxu0 0.0
  %1006 = vmatpush.msra.mxu0 0.0
  %1007 = vmatpush.msra.mxu0 0.0
  %1008 = vmatpush.msra.mxu0 %v963
  %1009 = vmatmul.f32.gmra.mxu0 %v959
  %v1010 = vpop.f32.mrf.mxu0
  %v1011 = vadd.f32 0.0, %v1010
  %1012 = vdwg.mxu0
  %1013 = vmatpush.msra.mxu0 0.0
  %1014 = vmatpush.msra.mxu0 0.0
  %1015 = vmatpush.msra.mxu0 0.0
  %1016 = vmatpush.msra.mxu0 0.0
  %1017 = vmatpush.msra.mxu0 0.0
  %1018 = vmatpush.msra.mxu0 0.0
  %1019 = vmatpush.msra.mxu0 0.0
  %1020 = vmatpush.msra.mxu0 0.0
  %1021 = vmatpush.msra.mxu0 0.0
  %1022 = vmatpush.msra.mxu0 0.0
  %1023 = vmatpush.msra.mxu0 0.0
  %1024 = vmatpush.msra.mxu0 0.0
  %1025 = vmatpush.msra.mxu0 0.0
  %1026 = vmatpush.msra.mxu0 0.0
  %1027 = vmatpush.msra.mxu0 0.0
  %1028 = vmatpush.msra.mxu0 %v965
  %1029 = vmatmul.f32.gmra.mxu0 %v959
  %v1030 = vpop.f32.mrf.mxu0
  %v1031 = vadd.f32 0.0, %v1030
  %1032 = vdwg.mxu0
  %1033 = vmatpush.msra.mxu0 0.0
  %1034 = vmatpush.msra.mxu0 0.0
  %1035 = vmatpush.msra.mxu0 0.0
  %1036 = vmatpush.msra.mxu0 0.0
  %1037 = vmatpush.msra.mxu0 0.0
  %1038 = vmatpush.msra.mxu0 0.0
  %1039 = vmatpush.msra.mxu0 0.0
  %1040 = vmatpush.msra.mxu0 0.0
  %1041 = vmatpush.msra.mxu0 0.0
  %1042 = vmatpush.msra.mxu0 0.0
  %1043 = vmatpush.msra.mxu0 0.0
  %1044 = vmatpush.msra.mxu0 0.0
  %1045 = vmatpush.msra.mxu0 0.0
  %1046 = vmatpush.msra.mxu0 0.0
  %1047 = vmatpush.msra.mxu0 0.0
  %1048 = vmatpush.msra.mxu0 %v967
  %1049 = vmatmul.f32.gmra.mxu0 %v959
  %v1050 = vpop.f32.mrf.mxu0
  %v1051 = vadd.f32 0.0, %v1050
  %1052 = vdwg.mxu0
  %1053 = vmatpush.msra.mxu0 0.0
  %1054 = vmatpush.msra.mxu0 0.0
  %1055 = vmatpush.msra.mxu0 0.0
  %1056 = vmatpush.msra.mxu0 0.0
  %1057 = vmatpush.msra.mxu0 0.0
  %1058 = vmatpush.msra.mxu0 0.0
  %1059 = vmatpush.msra.mxu0 0.0
  %1060 = vmatpush.msra.mxu0 0.0
  %1061 = vmatpush.msra.mxu0 0.0
  %1062 = vmatpush.msra.mxu0 0.0
  %1063 = vmatpush.msra.mxu0 0.0
  %1064 = vmatpush.msra.mxu0 0.0
  %1065 = vmatpush.msra.mxu0 0.0
  %1066 = vmatpush.msra.mxu0 0.0
  %1067 = vmatpush.msra.mxu0 0.0
  %1068 = vmatpush.msra.mxu0 %v969
  %1069 = vmatmul.f32.gmra.mxu0 %v959
  %v1070 = vpop.f32.mrf.mxu0
  %v1071 = vadd.f32 0.0, %v1070
  %1072 = vdwg.mxu0
  %1073 = vmatpush.msra.mxu0 0.0
  %1074 = vmatpush.msra.mxu0 0.0
  %1075 = vmatpush.msra.mxu0 0.0
  %1076 = vmatpush.msra.mxu0 0.0
  %1077 = vmatpush.msra.mxu0 0.0
  %1078 = vmatpush.msra.mxu0 0.0
  %1079 = vmatpush.msra.mxu0 0.0
  %1080 = vmatpush.msra.mxu0 0.0
  %1081 = vmatpush.msra.mxu0 0.0
  %1082 = vmatpush.msra.mxu0 0.0
  %1083 = vmatpush.msra.mxu0 0.0
  %1084 = vmatpush.msra.mxu0 0.0
  %1085 = vmatpush.msra.mxu0 0.0
  %1086 = vmatpush.msra.mxu0 0.0
  %1087 = vmatpush.msra.mxu0 0.0
  %1088 = vmatpush.msra.mxu0 %v971
  %1089 = vmatmul.f32.gmra.mxu0 %v959
  %v1090 = vpop.f32.mrf.mxu0
  %v1091 = vadd.f32 0.0, %v1090
  %1092 = vdwg.mxu0
  %v1093 = vadd.f32 %v907, %v991
  %v1094 = vadd.f32 %v908, %v1011
  %v1095 = vadd.f32 %v909, %v1031
  %v1096 = vadd.f32 %v910, %v1051
  %v1097 = vadd.f32 %v911, %v1071
  %v1098 = vadd.f32 %v912, %v1091
  %v1099 = vld [vmem:[%s0] sm:$0xff]
  %v1100 = vld [vmem:[%s0 + $0x8] sm:$0xff]
  %v1101 = vld [vmem:[%s0 + $0x10] sm:$0xff]
  %v1102 = vld [vmem:[%s0 + $0x18] sm:$0xf]
  %s1103 = scalar_lea.vmem %s1, 48
  %v1104 = vld [vmem:[%s1103] sm:$0xff]
  %1109 = vst [vmem:[#allocation1] ss:$2 sm:$0xff] %v1099
  %s1110 = scalar_lea.vmem [#allocation1], 16
  %1111 = vst [vmem:[%s1110] ss:$2 sm:$0xff] %v1100
  %s1112 = scalar_lea.vmem [#allocation1], 32
  %1113 = vst [vmem:[%s1112] ss:$2 sm:$0xff] %v1101
  %s1114 = scalar_lea.vmem [#allocation1], 48
  %1115 = vst [vmem:[%s1114] ss:$2 sm:$0xff] %v1102
  %v1116 = vld.sshfl [vmem:[#allocation1] sm:$0xff pattern:$0x75316420]
  %v1117 = vld.sshfl [vmem:[#allocation1 + $0x8] sm:$0xff pattern:$0x75316420]
  %v1118 = vld.sshfl [vmem:[#allocation1 + $0x10] sm:$0xff pattern:$0x75316420]
  %v1119 = vld.sshfl [vmem:[#allocation1 + $0x18] sm:$0xff pattern:$0x75316420]
  %v1120 = vld.sshfl [vmem:[#allocation1 + $0x20] sm:$0xff pattern:$0x75316420]
  %v1121 = vld.sshfl [vmem:[#allocation1 + $0x28] sm:$0xff pattern:$0x75316420]
  %v1122 = vld.sshfl [vmem:[#allocation1 + $0x30] sm:$0xff pattern:$0x75316420]
  %1123 = vrot.lane.b32.xlu0 %v1116, 92
  %v1124 = vpop.permute.xlu0 %1123
  %1125 = vrot.lane.b32.xlu0 %v1117, 92
  %v1126 = vpop.permute.xlu0 %1125
  %1127 = vrot.lane.b32.xlu0 %v1118, 92
  %v1128 = vpop.permute.xlu0 %1127
  %1129 = vrot.lane.b32.xlu0 %v1119, 92
  %v1130 = vpop.permute.xlu0 %1129
  %1131 = vrot.lane.b32.xlu0 %v1120, 92
  %v1132 = vpop.permute.xlu0 %1131
  %1133 = vrot.lane.b32.xlu0 %v1121, 92
  %v1134 = vpop.permute.xlu0 %1133
  %1135 = vrot.lane.b32.xlu0 %v1122, 92
  %v1136 = vpop.permute.xlu0 %1135
  %vm1137 = vcmask 752640
  %v1138 = vsel %vm1137, %v1124, %v1126
  %v1139 = vsel %vm1137, %v1126, %v1128
  %v1140 = vsel %vm1137, %v1128, %v1130
  %v1141 = vsel %vm1137, %v1130, %v1132
  %v1142 = vsel %vm1137, %v1132, %v1134
  %v1143 = vsel %vm1137, %v1134, %v1136
  %v1145 = vsel %vm69, %v1104, 0
  %v1147 = vsel %vm73, %v1138, 0
  %v1149 = vsel %vm73, %v1139, 0
  %v1151 = vsel %vm73, %v1140, 0
  %v1153 = vsel %vm73, %v1141, 0
  %v1155 = vsel %vm73, %v1142, 0
  %v1157 = vsel %vm73, %v1143, 0
  %1159 = vmatpush.msra.mxu0 0.0
  %1160 = vmatpush.msra.mxu0 0.0
  %1161 = vmatpush.msra.mxu0 0.0
  %1162 = vmatpush.msra.mxu0 0.0
  %1163 = vmatpush.msra.mxu0 0.0
  %1164 = vmatpush.msra.mxu0 0.0
  %1165 = vmatpush.msra.mxu0 0.0
  %1166 = vmatpush.msra.mxu0 0.0
  %1167 = vmatpush.msra.mxu0 0.0
  %1168 = vmatpush.msra.mxu0 0.0
  %1169 = vmatpush.msra.mxu0 0.0
  %1170 = vmatpush.msra.mxu0 0.0
  %1171 = vmatpush.msra.mxu0 0.0
  %1172 = vmatpush.msra.mxu0 0.0
  %1173 = vmatpush.msra.mxu0 0.0
  %1174 = vmatpush.msra.mxu0 %v1147
  %1175 = vmatmul.f32.gmra.mxu0 %v1145
  %v1176 = vpop.f32.mrf.mxu0
  %v1177 = vadd.f32 0.0, %v1176
  %1178 = vdwg.mxu0
  %1179 = vmatpush.msra.mxu0 0.0
  %1180 = vmatpush.msra.mxu0 0.0
  %1181 = vmatpush.msra.mxu0 0.0
  %1182 = vmatpush.msra.mxu0 0.0
  %1183 = vmatpush.msra.mxu0 0.0
  %1184 = vmatpush.msra.mxu0 0.0
  %1185 = vmatpush.msra.mxu0 0.0
  %1186 = vmatpush.msra.mxu0 0.0
  %1187 = vmatpush.msra.mxu0 0.0
  %1188 = vmatpush.msra.mxu0 0.0
  %1189 = vmatpush.msra.mxu0 0.0
  %1190 = vmatpush.msra.mxu0 0.0
  %1191 = vmatpush.msra.mxu0 0.0
  %1192 = vmatpush.msra.mxu0 0.0
  %1193 = vmatpush.msra.mxu0 0.0
  %1194 = vmatpush.msra.mxu0 %v1149
  %1195 = vmatmul.f32.gmra.mxu0 %v1145
  %v1196 = vpop.f32.mrf.mxu0
  %v1197 = vadd.f32 0.0, %v1196
  %1198 = vdwg.mxu0
  %1199 = vmatpush.msra.mxu0 0.0
  %1200 = vmatpush.msra.mxu0 0.0
  %1201 = vmatpush.msra.mxu0 0.0
  %1202 = vmatpush.msra.mxu0 0.0
  %1203 = vmatpush.msra.mxu0 0.0
  %1204 = vmatpush.msra.mxu0 0.0
  %1205 = vmatpush.msra.mxu0 0.0
  %1206 = vmatpush.msra.mxu0 0.0
  %1207 = vmatpush.msra.mxu0 0.0
  %1208 = vmatpush.msra.mxu0 0.0
  %1209 = vmatpush.msra.mxu0 0.0
  %1210 = vmatpush.msra.mxu0 0.0
  %1211 = vmatpush.msra.mxu0 0.0
  %1212 = vmatpush.msra.mxu0 0.0
  %1213 = vmatpush.msra.mxu0 0.0
  %1214 = vmatpush.msra.mxu0 %v1151
  %1215 = vmatmul.f32.gmra.mxu0 %v1145
  %v1216 = vpop.f32.mrf.mxu0
  %v1217 = vadd.f32 0.0, %v1216
  %1218 = vdwg.mxu0
  %1219 = vmatpush.msra.mxu0 0.0
  %1220 = vmatpush.msra.mxu0 0.0
  %1221 = vmatpush.msra.mxu0 0.0
  %1222 = vmatpush.msra.mxu0 0.0
  %1223 = vmatpush.msra.mxu0 0.0
  %1224 = vmatpush.msra.mxu0 0.0
  %1225 = vmatpush.msra.mxu0 0.0
  %1226 = vmatpush.msra.mxu0 0.0
  %1227 = vmatpush.msra.mxu0 0.0
  %1228 = vmatpush.msra.mxu0 0.0
  %1229 = vmatpush.msra.mxu0 0.0
  %1230 = vmatpush.msra.mxu0 0.0
  %1231 = vmatpush.msra.mxu0 0.0
  %1232 = vmatpush.msra.mxu0 0.0
  %1233 = vmatpush.msra.mxu0 0.0
  %1234 = vmatpush.msra.mxu0 %v1153
  %1235 = vmatmul.f32.gmra.mxu0 %v1145
  %v1236 = vpop.f32.mrf.mxu0
  %v1237 = vadd.f32 0.0, %v1236
  %1238 = vdwg.mxu0
  %1239 = vmatpush.msra.mxu0 0.0
  %1240 = vmatpush.msra.mxu0 0.0
  %1241 = vmatpush.msra.mxu0 0.0
  %1242 = vmatpush.msra.mxu0 0.0
  %1243 = vmatpush.msra.mxu0 0.0
  %1244 = vmatpush.msra.mxu0 0.0
  %1245 = vmatpush.msra.mxu0 0.0
  %1246 = vmatpush.msra.mxu0 0.0
  %1247 = vmatpush.msra.mxu0 0.0
  %1248 = vmatpush.msra.mxu0 0.0
  %1249 = vmatpush.msra.mxu0 0.0
  %1250 = vmatpush.msra.mxu0 0.0
  %1251 = vmatpush.msra.mxu0 0.0
  %1252 = vmatpush.msra.mxu0 0.0
  %1253 = vmatpush.msra.mxu0 0.0
  %1254 = vmatpush.msra.mxu0 %v1155
  %1255 = vmatmul.f32.gmra.mxu0 %v1145
  %v1256 = vpop.f32.mrf.mxu0
  %v1257 = vadd.f32 0.0, %v1256
  %1258 = vdwg.mxu0
  %1259 = vmatpush.msra.mxu0 0.0
  %1260 = vmatpush.msra.mxu0 0.0
  %1261 = vmatpush.msra.mxu0 0.0
  %1262 = vmatpush.msra.mxu0 0.0
  %1263 = vmatpush.msra.mxu0 0.0
  %1264 = vmatpush.msra.mxu0 0.0
  %1265 = vmatpush.msra.mxu0 0.0
  %1266 = vmatpush.msra.mxu0 0.0
  %1267 = vmatpush.msra.mxu0 0.0
  %1268 = vmatpush.msra.mxu0 0.0
  %1269 = vmatpush.msra.mxu0 0.0
  %1270 = vmatpush.msra.mxu0 0.0
  %1271 = vmatpush.msra.mxu0 0.0
  %1272 = vmatpush.msra.mxu0 0.0
  %1273 = vmatpush.msra.mxu0 0.0
  %1274 = vmatpush.msra.mxu0 %v1157
  %1275 = vmatmul.f32.gmra.mxu0 %v1145
  %v1276 = vpop.f32.mrf.mxu0
  %v1277 = vadd.f32 0.0, %v1276
  %1278 = vdwg.mxu0
  %v1279 = vadd.f32 %v1093, %v1177
  %v1280 = vadd.f32 %v1094, %v1197
  %v1281 = vadd.f32 %v1095, %v1217
  %v1282 = vadd.f32 %v1096, %v1237
  %v1283 = vadd.f32 %v1097, %v1257
  %v1284 = vadd.f32 %v1098, %v1277
  %v1285 = vld [vmem:[%s0] sm:$0xff]
  %v1286 = vld [vmem:[%s0 + $0x8] sm:$0xff]
  %v1287 = vld [vmem:[%s0 + $0x10] sm:$0xff]
  %v1288 = vld [vmem:[%s0 + $0x18] sm:$0xf]
  %s1289 = scalar_lea.vmem %s1, 56
  %v1290 = vld [vmem:[%s1289] sm:$0xff]
  %1295 = vst [vmem:[#allocation1] ss:$2 sm:$0xff] %v1285
  %s1296 = scalar_lea.vmem [#allocation1], 16
  %1297 = vst [vmem:[%s1296] ss:$2 sm:$0xff] %v1286
  %s1298 = scalar_lea.vmem [#allocation1], 32
  %1299 = vst [vmem:[%s1298] ss:$2 sm:$0xff] %v1287
  %s1300 = scalar_lea.vmem [#allocation1], 48
  %1301 = vst [vmem:[%s1300] ss:$2 sm:$0xff] %v1288
  %v1302 = vld.sshfl [vmem:[#allocation1] sm:$0xff pattern:$0x75316420]
  %v1303 = vld.sshfl [vmem:[#allocation1 + $0x8] sm:$0xff pattern:$0x75316420]
  %v1304 = vld.sshfl [vmem:[#allocation1 + $0x10] sm:$0xff pattern:$0x75316420]
  %v1305 = vld.sshfl [vmem:[#allocation1 + $0x18] sm:$0xff pattern:$0x75316420]
  %v1306 = vld.sshfl [vmem:[#allocation1 + $0x20] sm:$0xff pattern:$0x75316420]
  %v1307 = vld.sshfl [vmem:[#allocation1 + $0x28] sm:$0xff pattern:$0x75316420]
  %v1308 = vld.sshfl [vmem:[#allocation1 + $0x30] sm:$0xff pattern:$0x75316420]
  %1309 = vrot.lane.b32.xlu0 %v1302, 91
  %v1310 = vpop.permute.xlu0 %1309
  %1311 = vrot.lane.b32.xlu0 %v1303, 91
  %v1312 = vpop.permute.xlu0 %1311
  %1313 = vrot.lane.b32.xlu0 %v1304, 91
  %v1314 = vpop.permute.xlu0 %1313
  %1315 = vrot.lane.b32.xlu0 %v1305, 91
  %v1316 = vpop.permute.xlu0 %1315
  %1317 = vrot.lane.b32.xlu0 %v1306, 91
  %v1318 = vpop.permute.xlu0 %1317
  %1319 = vrot.lane.b32.xlu0 %v1307, 91
  %v1320 = vpop.permute.xlu0 %1319
  %1321 = vrot.lane.b32.xlu0 %v1308, 91
  %v1322 = vpop.permute.xlu0 %1321
  %vm1323 = vcmask 744448
  %v1324 = vsel %vm1323, %v1310, %v1312
  %v1325 = vsel %vm1323, %v1312, %v1314
  %v1326 = vsel %vm1323, %v1314, %v1316
  %v1327 = vsel %vm1323, %v1316, %v1318
  %v1328 = vsel %vm1323, %v1318, %v1320
  %v1329 = vsel %vm1323, %v1320, %v1322
  %v1331 = vsel %vm69, %v1290, 0
  %v1333 = vsel %vm73, %v1324, 0
  %v1335 = vsel %vm73, %v1325, 0
  %v1337 = vsel %vm73, %v1326, 0
  %v1339 = vsel %vm73, %v1327, 0
  %v1341 = vsel %vm73, %v1328, 0
  %v1343 = vsel %vm73, %v1329, 0
  %1345 = vmatpush.msra.mxu0 0.0
  %1346 = vmatpush.msra.mxu0 0.0
  %1347 = vmatpush.msra.mxu0 0.0
  %1348 = vmatpush.msra.mxu0 0.0
  %1349 = vmatpush.msra.mxu0 0.0
  %1350 = vmatpush.msra.mxu0 0.0
  %1351 = vmatpush.msra.mxu0 0.0
  %1352 = vmatpush.msra.mxu0 0.0
  %1353 = vmatpush.msra.mxu0 0.0
  %1354 = vmatpush.msra.mxu0 0.0
  %1355 = vmatpush.msra.mxu0 0.0
  %1356 = vmatpush.msra.mxu0 0.0
  %1357 = vmatpush.msra.mxu0 0.0
  %1358 = vmatpush.msra.mxu0 0.0
  %1359 = vmatpush.msra.mxu0 0.0
  %1360 = vmatpush.msra.mxu0 %v1333
  %1361 = vmatmul.f32.gmra.mxu0 %v1331
  %v1362 = vpop.f32.mrf.mxu0
  %v1363 = vadd.f32 0.0, %v1362
  %1364 = vdwg.mxu0
  %1365 = vmatpush.msra.mxu0 0.0
  %1366 = vmatpush.msra.mxu0 0.0
  %1367 = vmatpush.msra.mxu0 0.0
  %1368 = vmatpush.msra.mxu0 0.0
  %1369 = vmatpush.msra.mxu0 0.0
  %1370 = vmatpush.msra.mxu0 0.0
  %1371 = vmatpush.msra.mxu0 0.0
  %1372 = vmatpush.msra.mxu0 0.0
  %1373 = vmatpush.msra.mxu0 0.0
  %1374 = vmatpush.msra.mxu0 0.0
  %1375 = vmatpush.msra.mxu0 0.0
  %1376 = vmatpush.msra.mxu0 0.0
  %1377 = vmatpush.msra.mxu0 0.0
  %1378 = vmatpush.msra.mxu0 0.0
  %1379 = vmatpush.msra.mxu0 0.0
  %1380 = vmatpush.msra.mxu0 %v1335
  %1381 = vmatmul.f32.gmra.mxu0 %v1331
  %v1382 = vpop.f32.mrf.mxu0
  %v1383 = vadd.f32 0.0, %v1382
  %1384 = vdwg.mxu0
  %1385 = vmatpush.msra.mxu0 0.0
  %1386 = vmatpush.msra.mxu0 0.0
  %1387 = vmatpush.msra.mxu0 0.0
  %1388 = vmatpush.msra.mxu0 0.0
  %1389 = vmatpush.msra.mxu0 0.0
  %1390 = vmatpush.msra.mxu0 0.0
  %1391 = vmatpush.msra.mxu0 0.0
  %1392 = vmatpush.msra.mxu0 0.0
  %1393 = vmatpush.msra.mxu0 0.0
  %1394 = vmatpush.msra.mxu0 0.0
  %1395 = vmatpush.msra.mxu0 0.0
  %1396 = vmatpush.msra.mxu0 0.0
  %1397 = vmatpush.msra.mxu0 0.0
  %1398 = vmatpush.msra.mxu0 0.0
  %1399 = vmatpush.msra.mxu0 0.0
  %1400 = vmatpush.msra.mxu0 %v1337
  %1401 = vmatmul.f32.gmra.mxu0 %v1331
  %v1402 = vpop.f32.mrf.mxu0
  %v1403 = vadd.f32 0.0, %v1402
  %1404 = vdwg.mxu0
  %1405 = vmatpush.msra.mxu0 0.0
  %1406 = vmatpush.msra.mxu0 0.0
  %1407 = vmatpush.msra.mxu0 0.0
  %1408 = vmatpush.msra.mxu0 0.0
  %1409 = vmatpush.msra.mxu0 0.0
  %1410 = vmatpush.msra.mxu0 0.0
  %1411 = vmatpush.msra.mxu0 0.0
  %1412 = vmatpush.msra.mxu0 0.0
  %1413 = vmatpush.msra.mxu0 0.0
  %1414 = vmatpush.msra.mxu0 0.0
  %1415 = vmatpush.msra.mxu0 0.0
  %1416 = vmatpush.msra.mxu0 0.0
  %1417 = vmatpush.msra.mxu0 0.0
  %1418 = vmatpush.msra.mxu0 0.0
  %1419 = vmatpush.msra.mxu0 0.0
  %1420 = vmatpush.msra.mxu0 %v1339
  %1421 = vmatmul.f32.gmra.mxu0 %v1331
  %v1422 = vpop.f32.mrf.mxu0
  %v1423 = vadd.f32 0.0, %v1422
  %1424 = vdwg.mxu0
  %1425 = vmatpush.msra.mxu0 0.0
  %1426 = vmatpush.msra.mxu0 0.0
  %1427 = vmatpush.msra.mxu0 0.0
  %1428 = vmatpush.msra.mxu0 0.0
  %1429 = vmatpush.msra.mxu0 0.0
  %1430 = vmatpush.msra.mxu0 0.0
  %1431 = vmatpush.msra.mxu0 0.0
  %1432 = vmatpush.msra.mxu0 0.0
  %1433 = vmatpush.msra.mxu0 0.0
  %1434 = vmatpush.msra.mxu0 0.0
  %1435 = vmatpush.msra.mxu0 0.0
  %1436 = vmatpush.msra.mxu0 0.0
  %1437 = vmatpush.msra.mxu0 0.0
  %1438 = vmatpush.msra.mxu0 0.0
  %1439 = vmatpush.msra.mxu0 0.0
  %1440 = vmatpush.msra.mxu0 %v1341
  %1441 = vmatmul.f32.gmra.mxu0 %v1331
  %v1442 = vpop.f32.mrf.mxu0
  %v1443 = vadd.f32 0.0, %v1442
  %1444 = vdwg.mxu0
  %1445 = vmatpush.msra.mxu0 0.0
  %1446 = vmatpush.msra.mxu0 0.0
  %1447 = vmatpush.msra.mxu0 0.0
  %1448 = vmatpush.msra.mxu0 0.0
  %1449 = vmatpush.msra.mxu0 0.0
  %1450 = vmatpush.msra.mxu0 0.0
  %1451 = vmatpush.msra.mxu0 0.0
  %1452 = vmatpush.msra.mxu0 0.0
  %1453 = vmatpush.msra.mxu0 0.0
  %1454 = vmatpush.msra.mxu0 0.0
  %1455 = vmatpush.msra.mxu0 0.0
  %1456 = vmatpush.msra.mxu0 0.0
  %1457 = vmatpush.msra.mxu0 0.0
  %1458 = vmatpush.msra.mxu0 0.0
  %1459 = vmatpush.msra.mxu0 0.0
  %1460 = vmatpush.msra.mxu0 %v1343
  %1461 = vmatmul.f32.gmra.mxu0 %v1331
  %v1462 = vpop.f32.mrf.mxu0
  %v1463 = vadd.f32 0.0, %v1462
  %1464 = vdwg.mxu0
  %v1465 = vadd.f32 %v1279, %v1363
  %v1466 = vadd.f32 %v1280, %v1383
  %v1467 = vadd.f32 %v1281, %v1403
  %v1468 = vadd.f32 %v1282, %v1423
  %v1469 = vadd.f32 %v1283, %v1443
  %v1470 = vadd.f32 %v1284, %v1463
  %v1471 = vld [vmem:[%s0] sm:$0xff]
  %v1472 = vld [vmem:[%s0 + $0x8] sm:$0xff]
  %v1473 = vld [vmem:[%s0 + $0x10] sm:$0xff]
  %v1474 = vld [vmem:[%s0 + $0x18] sm:$0xf]
  %s1475 = scalar_lea.vmem %s1, 64
  %v1476 = vld [vmem:[%s1475] sm:$0xff]
  %1481 = vst [vmem:[#allocation1] ss:$2 sm:$0xff] %v1471
  %s1482 = scalar_lea.vmem [#allocation1], 16
  %1483 = vst [vmem:[%s1482] ss:$2 sm:$0xff] %v1472
  %s1484 = scalar_lea.vmem [#allocation1], 32
  %1485 = vst [vmem:[%s1484] ss:$2 sm:$0xff] %v1473
  %s1486 = scalar_lea.vmem [#allocation1], 48
  %1487 = vst [vmem:[%s1486] ss:$2 sm:$0xff] %v1474
  %v1488 = vld.sshfl [vmem:[#allocation1] sm:$0xff pattern:$0x75316420]
  %v1489 = vld.sshfl [vmem:[#allocation1 + $0x8] sm:$0xff pattern:$0x75316420]
  %v1490 = vld.sshfl [vmem:[#allocation1 + $0x10] sm:$0xff pattern:$0x75316420]
  %v1491 = vld.sshfl [vmem:[#allocation1 + $0x18] sm:$0xff pattern:$0x75316420]
  %v1492 = vld.sshfl [vmem:[#allocation1 + $0x20] sm:$0xff pattern:$0x75316420]
  %v1493 = vld.sshfl [vmem:[#allocation1 + $0x28] sm:$0xff pattern:$0x75316420]
  %v1494 = vld.sshfl [vmem:[#allocation1 + $0x30] sm:$0xff pattern:$0x75316420]
  %1495 = vrot.lane.b32.xlu0 %v1488, 90
  %v1496 = vpop.permute.xlu0 %1495
  %1497 = vrot.lane.b32.xlu0 %v1489, 90
  %v1498 = vpop.permute.xlu0 %1497
  %1499 = vrot.lane.b32.xlu0 %v1490, 90
  %v1500 = vpop.permute.xlu0 %1499
  %1501 = vrot.lane.b32.xlu0 %v1491, 90
  %v1502 = vpop.permute.xlu0 %1501
  %1503 = vrot.lane.b32.xlu0 %v1492, 90
  %v1504 = vpop.permute.xlu0 %1503
  %1505 = vrot.lane.b32.xlu0 %v1493, 90
  %v1506 = vpop.permute.xlu0 %1505
  %1507 = vrot.lane.b32.xlu0 %v1494, 90
  %v1508 = vpop.permute.xlu0 %1507
  %vm1509 = vcmask 736256
  %v1510 = vsel %vm1509, %v1496, %v1498
  %v1511 = vsel %vm1509, %v1498, %v1500
  %v1512 = vsel %vm1509, %v1500, %v1502
  %v1513 = vsel %vm1509, %v1502, %v1504
  %v1514 = vsel %vm1509, %v1504, %v1506
  %v1515 = vsel %vm1509, %v1506, %v1508
  %v1517 = vsel %vm69, %v1476, 0
  %v1519 = vsel %vm73, %v1510, 0
  %v1521 = vsel %vm73, %v1511, 0
  %v1523 = vsel %vm73, %v1512, 0
  %v1525 = vsel %vm73, %v1513, 0
  %v1527 = vsel %vm73, %v1514, 0
  %v1529 = vsel %vm73, %v1515, 0
  %1531 = vmatpush.msra.mxu0 0.0
  %1532 = vmatpush.msra.mxu0 0.0
  %1533 = vmatpush.msra.mxu0 0.0
  %1534 = vmatpush.msra.mxu0 0.0
  %1535 = vmatpush.msra.mxu0 0.0
  %1536 = vmatpush.msra.mxu0 0.0
  %1537 = vmatpush.msra.mxu0 0.0
  %1538 = vmatpush.msra.mxu0 0.0
  %1539 = vmatpush.msra.mxu0 0.0
  %1540 = vmatpush.msra.mxu0 0.0
  %1541 = vmatpush.msra.mxu0 0.0
  %1542 = vmatpush.msra.mxu0 0.0
  %1543 = vmatpush.msra.mxu0 0.0
  %1544 = vmatpush.msra.mxu0 0.0
  %1545 = vmatpush.msra.mxu0 0.0
  %1546 = vmatpush.msra.mxu0 %v1519
  %1547 = vmatmul.f32.gmra.mxu0 %v1517
  %v1548 = vpop.f32.mrf.mxu0
  %v1549 = vadd.f32 0.0, %v1548
  %1550 = vdwg.mxu0
  %1551 = vmatpush.msra.mxu0 0.0
  %1552 = vmatpush.msra.mxu0 0.0
  %1553 = vmatpush.msra.mxu0 0.0
  %1554 = vmatpush.msra.mxu0 0.0
  %1555 = vmatpush.msra.mxu0 0.0
  %1556 = vmatpush.msra.mxu0 0.0
  %1557 = vmatpush.msra.mxu0 0.0
  %1558 = vmatpush.msra.mxu0 0.0
  %1559 = vmatpush.msra.mxu0 0.0
  %1560 = vmatpush.msra.mxu0 0.0
  %1561 = vmatpush.msra.mxu0 0.0
  %1562 = vmatpush.msra.mxu0 0.0
  %1563 = vmatpush.msra.mxu0 0.0
  %1564 = vmatpush.msra.mxu0 0.0
  %1565 = vmatpush.msra.mxu0 0.0
  %1566 = vmatpush.msra.mxu0 %v1521
  %1567 = vmatmul.f32.gmra.mxu0 %v1517
  %v1568 = vpop.f32.mrf.mxu0
  %v1569 = vadd.f32 0.0, %v1568
  %1570 = vdwg.mxu0
  %1571 = vmatpush.msra.mxu0 0.0
  %1572 = vmatpush.msra.mxu0 0.0
  %1573 = vmatpush.msra.mxu0 0.0
  %1574 = vmatpush.msra.mxu0 0.0
  %1575 = vmatpush.msra.mxu0 0.0
  %1576 = vmatpush.msra.mxu0 0.0
  %1577 = vmatpush.msra.mxu0 0.0
  %1578 = vmatpush.msra.mxu0 0.0
  %1579 = vmatpush.msra.mxu0 0.0
  %1580 = vmatpush.msra.mxu0 0.0
  %1581 = vmatpush.msra.mxu0 0.0
  %1582 = vmatpush.msra.mxu0 0.0
  %1583 = vmatpush.msra.mxu0 0.0
  %1584 = vmatpush.msra.mxu0 0.0
  %1585 = vmatpush.msra.mxu0 0.0
  %1586 = vmatpush.msra.mxu0 %v1523
  %1587 = vmatmul.f32.gmra.mxu0 %v1517
  %v1588 = vpop.f32.mrf.mxu0
  %v1589 = vadd.f32 0.0, %v1588
  %1590 = vdwg.mxu0
  %1591 = vmatpush.msra.mxu0 0.0
  %1592 = vmatpush.msra.mxu0 0.0
  %1593 = vmatpush.msra.mxu0 0.0
  %1594 = vmatpush.msra.mxu0 0.0
  %1595 = vmatpush.msra.mxu0 0.0
  %1596 = vmatpush.msra.mxu0 0.0
  %1597 = vmatpush.msra.mxu0 0.0
  %1598 = vmatpush.msra.mxu0 0.0
  %1599 = vmatpush.msra.mxu0 0.0
  %1600 = vmatpush.msra.mxu0 0.0
  %1601 = vmatpush.msra.mxu0 0.0
  %1602 = vmatpush.msra.mxu0 0.0
  %1603 = vmatpush.msra.mxu0 0.0
  %1604 = vmatpush.msra.mxu0 0.0
  %1605 = vmatpush.msra.mxu0 0.0
  %1606 = vmatpush.msra.mxu0 %v1525
  %1607 = vmatmul.f32.gmra.mxu0 %v1517
  %v1608 = vpop.f32.mrf.mxu0
  %v1609 = vadd.f32 0.0, %v1608
  %1610 = vdwg.mxu0
  %1611 = vmatpush.msra.mxu0 0.0
  %1612 = vmatpush.msra.mxu0 0.0
  %1613 = vmatpush.msra.mxu0 0.0
  %1614 = vmatpush.msra.mxu0 0.0
  %1615 = vmatpush.msra.mxu0 0.0
  %1616 = vmatpush.msra.mxu0 0.0
  %1617 = vmatpush.msra.mxu0 0.0
  %1618 = vmatpush.msra.mxu0 0.0
  %1619 = vmatpush.msra.mxu0 0.0
  %1620 = vmatpush.msra.mxu0 0.0
  %1621 = vmatpush.msra.mxu0 0.0
  %1622 = vmatpush.msra.mxu0 0.0
  %1623 = vmatpush.msra.mxu0 0.0
  %1624 = vmatpush.msra.mxu0 0.0
  %1625 = vmatpush.msra.mxu0 0.0
  %1626 = vmatpush.msra.mxu0 %v1527
  %1627 = vmatmul.f32.gmra.mxu0 %v1517
  %v1628 = vpop.f32.mrf.mxu0
  %v1629 = vadd.f32 0.0, %v1628
  %1630 = vdwg.mxu0
  %1631 = vmatpush.msra.mxu0 0.0
  %1632 = vmatpush.msra.mxu0 0.0
  %1633 = vmatpush.msra.mxu0 0.0
  %1634 = vmatpush.msra.mxu0 0.0
  %1635 = vmatpush.msra.mxu0 0.0
  %1636 = vmatpush.msra.mxu0 0.0
  %1637 = vmatpush.msra.mxu0 0.0
  %1638 = vmatpush.msra.mxu0 0.0
  %1639 = vmatpush.msra.mxu0 0.0
  %1640 = vmatpush.msra.mxu0 0.0
  %1641 = vmatpush.msra.mxu0 0.0
  %1642 = vmatpush.msra.mxu0 0.0
  %1643 = vmatpush.msra.mxu0 0.0
  %1644 = vmatpush.msra.mxu0 0.0
  %1645 = vmatpush.msra.mxu0 0.0
  %1646 = vmatpush.msra.mxu0 %v1529
  %1647 = vmatmul.f32.gmra.mxu0 %v1517
  %v1648 = vpop.f32.mrf.mxu0
  %v1649 = vadd.f32 0.0, %v1648
  %1650 = vdwg.mxu0
  %v1651 = vadd.f32 %v1465, %v1549
  %v1652 = vadd.f32 %v1466, %v1569
  %v1653 = vadd.f32 %v1467, %v1589
  %v1654 = vadd.f32 %v1468, %v1609
  %v1655 = vadd.f32 %v1469, %v1629
  %v1656 = vadd.f32 %v1470, %v1649
  %v1657 = vld [vmem:[%s2] sm:$0x3f]
  %v1659 = vperm.slane %v1657, 0
  %v1660 = vperm.slane %v1657, 1
  %v1661 = vperm.slane %v1657, 2
  %v1662 = vperm.slane %v1657, 3
  %v1663 = vperm.slane %v1657, 4
  %v1664 = vperm.slane %v1657, 5
  %v1671 = vmul.f32 %v1651, %v1659
  %v1672 = vmul.f32 %v1652, %v1660
  %v1673 = vmul.f32 %v1653, %v1661
  %v1674 = vmul.f32 %v1654, %v1662
  %v1675 = vmul.f32 %v1655, %v1663
  %v1676 = vmul.f32 %v1656, %v1664
  %v1677 = vadd.f32 %v1671, %v1672
  %v1678 = vadd.f32 %v1677, %v1673
  %v1679 = vadd.f32 %v1678, %v1674
  %v1680 = vadd.f32 %v1679, %v1675
  %v1681 = vadd.f32 %v1680, %v1676
  %1682 = vadd.xlane.f32.xlu0 %v1681
  %v1683 = vpop.xlane.xlu0 %1682
  %v1684 = vmul.f32 %v1683, 0.001953125
  %v1685 = vsub.f32 %v1651, %v1684
  %v1686 = vsub.f32 %v1652, %v1684
  %v1687 = vsub.f32 %v1653, %v1684
  %v1688 = vsub.f32 %v1654, %v1684
  %v1689 = vsub.f32 %v1655, %v1684
  %v1690 = vsub.f32 %v1656, %v1684
  %v1691 = vmul.f32 %v1685, %v1685
  %v1692 = vmul.f32 %v1686, %v1686
  %v1693 = vmul.f32 %v1687, %v1687
  %v1694 = vmul.f32 %v1688, %v1688
  %v1695 = vmul.f32 %v1689, %v1689
  %v1696 = vmul.f32 %v1690, %v1690
  %v1697 = vmul.f32 %v1691, %v1659
  %v1698 = vmul.f32 %v1692, %v1660
  %v1699 = vmul.f32 %v1693, %v1661
  %v1700 = vmul.f32 %v1694, %v1662
  %v1701 = vmul.f32 %v1695, %v1663
  %v1702 = vmul.f32 %v1696, %v1664
  %v1703 = vadd.f32 %v1697, %v1698
  %v1704 = vadd.f32 %v1703, %v1699
  %v1705 = vadd.f32 %v1704, %v1700
  %v1706 = vadd.f32 %v1705, %v1701
  %v1707 = vadd.f32 %v1706, %v1702
  %1708 = vadd.xlane.f32.xlu0 %v1707
  %v1709 = vpop.xlane.xlu0 %1708
  %v1710 = vmul.f32 %v1709, 0.001953125
  %v1711 = vld [vmem:[%s3] sm:$0xff]
  %v1712 = vadd.f32 %v1710, 1e-05
  %v1713 = vrsqrt.pop %v1712
  %v1714 = vmul.f32 %v1713, %v1712
  %v1715 = vmul.f32 %v1714, %v1713
  %v1716 = vmul.f32 0.5, %v1715
  %v1717 = vsub.f32 1.5, %v1716
  %v1718 = vmul.f32 %v1713, %v1717
  %vm1719 = vweird.f32 %v1712
  %vm1720 = vweird.f32 %v1713
  %vm1721 = vmor %vm1719, %vm1720
  %v1722 = vsel %vm1721, %v1713, %v1718
  %v1723 = vmul.f32 %v1711, %v1722
  %v1724 = vld [vmem:[%s4] sm:$0xff]
  %v1725 = vmul.f32 %v1684, %v1723
  %v1726 = vsub.f32 %v1724, %v1725
  %1728 = vset.pattern.permute.xlu0 0
  %1729 = vperm.xlu0 %1728, %v1723
  %v1730 = vpop.permute.xlu0 %1729
  %v1732 = vmul.f32 %v1651, %v1730
  %v1733 = vmul.f32 %v1652, %v1730
  %v1734 = vmul.f32 %v1653, %v1730
  %v1735 = vmul.f32 %v1654, %v1730
  %v1736 = vmul.f32 %v1655, %v1730
  %v1737 = vmul.f32 %v1656, %v1730
  %1739 = vset.pattern.permute.xlu0 0
  %1740 = vperm.xlu0 %1739, %v1726
  %v1741 = vpop.permute.xlu0 %1740
  %v1743 = vadd.f32 %v1732, %v1741
  %v1744 = vadd.f32 %v1733, %v1741
  %v1745 = vadd.f32 %v1734, %v1741
  %v1746 = vadd.f32 %v1735, %v1741
  %v1747 = vadd.f32 %v1736, %v1741
  %v1748 = vadd.f32 %v1737, %v1741
  %vm1749 = vcmp.ge.f32.partialorder %v1743, 0.0
  %vm1750 = vcmp.ge.f32.partialorder %v1744, 0.0
  %vm1751 = vcmp.ge.f32.partialorder %v1745, 0.0
  %vm1752 = vcmp.ge.f32.partialorder %v1746, 0.0
  %vm1753 = vcmp.ge.f32.partialorder %v1747, 0.0
  %vm1754 = vcmp.ge.f32.partialorder %v1748, 0.0
  %v1755 = vmul.f32 %v1743, 0.1
  %v1756 = vmul.f32 %v1744, 0.1
  %v1757 = vmul.f32 %v1745, 0.1
  %v1758 = vmul.f32 %v1746, 0.1
  %v1759 = vmul.f32 %v1747, 0.1
  %v1760 = vmul.f32 %v1748, 0.1
  %v1761 = vsel %vm1749, %v1743, %v1755
  %v1762 = vsel %vm1750, %v1744, %v1756
  %v1763 = vsel %vm1751, %v1745, %v1757
  %v1764 = vsel %vm1752, %v1746, %v1758
  %v1765 = vsel %vm1753, %v1747, %v1759
  %v1766 = vsel %vm1754, %v1748, %v1760
  %1767 = vst [vmem:[%s5] sm:$0xff] %v1761
  %1768 = vst [vmem:[%s5 + $0x8] sm:$0xff] %v1762
  %1769 = vst [vmem:[%s5 + $0x10] sm:$0xff] %v1763
  %1770 = vst [vmem:[%s5 + $0x18] sm:$0xff] %v1764
  %1771 = vst [vmem:[%s5 + $0x20] sm:$0xff] %v1765
  %1772 = vst [vmem:[%s5 + $0x28] sm:$0xff] %v1766
  // Predicated region
  $region22: #{_lambda_.1} parent=0 // pred_check
    _
  $region23: #{_lambda_.1} parent=0 // pred_check_branch
    %1774 = sbr.rel (0) target = $region25
  $region24: #{_lambda_.1} parent=0 // pred_region
    _
  $region25: #{_lambda_.1} parent=0 // pred_fallthru
    _
  // Predicated region
  $region26: #{_lambda_.1} parent=0 // pred_check
    _
  $region27: #{_lambda_.1} parent=0 // pred_check_branch
    %1776 = sbr.rel (0) target = $region29
  $region28: #{_lambda_.1} parent=0 // pred_region
    _
  $region29: #{_lambda_.1} parent=0 // pred_fallthru
    _

</llo_original>
